<compile_context>
chip_gen: v5e
topology: v5e:2x2
jax: 0.10.0
libtpu: 0.0.40
codegen_flags: <defaults>
</compile_context>

<pallas_src>
import jax
import jax.numpy as jnp
import numpy as np
from jax.experimental import pallas as pl
from jax.experimental.pallas import tpu as pltpu

# --------------------------- tunables ---------------------------------------
LANE = 128
# Rows (N*Ho*Wo) per grid step.  256 keeps the toy test on a multi-step grid so
# the cross-tile BN accumulation path is exercised; for production shapes raise
# to 512-2048 on v5e/v6e (128 MiB VMEM) and keep roughly half that on v7x
# (64 MiB VMEM).
TM_MAX = 256
# Set to jnp.bfloat16 on v6e/v7x to halve matmul-input HBM traffic (BN math and
# MXU accumulation stay f32).  f32 kept as default so the strict 2e-3 parity
# check against the HIGHEST-precision reference holds.
COMPUTE_DTYPE = jnp.float32
VMEM_LIMIT_BYTES = 48 * 1024 * 1024


# --------------------------- kernels -----------------------------------------
def _conv_stats_kernel(x_ref, w_ref, conv_ref, sum_ref, sq_ref):
    """Per row-tile: conv = x @ w (single MXU matmul, K folded over the 9 taps),
    plus per-channel partial sum / sum-of-squares accumulated across the grid."""

    @pl.when(pl.program_id(0) == 0)
    def _init():
        sum_ref[...] = jnp.zeros_like(sum_ref)
        sq_ref[...] = jnp.zeros_like(sq_ref)

    acc = jnp.dot(x_ref[...], w_ref[...], preferred_element_type=jnp.float32)
    conv_ref[...] = acc

    tm, cp = acc.shape
    g = acc.reshape(tm // 8, 8, cp)        # layout-preserving: (8, 128) subtiles
    sum_ref[...] += jnp.sum(g, axis=0)     # cheap cross-vreg VPU adds (no XLU)
    sq_ref[...] += jnp.sum(g * g, axis=0)


def _make_bn_relu_kernel(with_residual):
    if with_residual:
        def kernel(conv_ref, scale_ref, shift_ref, res_ref, out_ref):
            y = conv_ref[...] * scale_ref[...] + shift_ref[...] + res_ref[...]
            out_ref[...] = jnp.maximum(y, 0.0).astype(out_ref.dtype)
    else:
        def kernel(conv_ref, scale_ref, shift_ref, out_ref):
            y = conv_ref[...] * scale_ref[...] + shift_ref[...]
            out_ref[...] = jnp.maximum(y, 0.0).astype(out_ref.dtype)
    return kernel


# --------------------------- stage wrapper -----------------------------------
def conv_bn_relu_stage(x_taps, w, gamma, beta, m_real, tm, residual=None, eps=1e-5):
    """x_taps: (M_pad, Kp), w: (Kp, Cp), gamma/beta: (1, Cp),
    residual: optional (M_pad, Cp).  Returns (M_pad, Cp) float32."""
    m_pad, kp = x_taps.shape
    cp = w.shape[1]
    grid = (m_pad // tm,)

    # ---- pass 1: conv + per-channel partial statistics --------------------
    conv_out, psum, psq = pl.pallas_call(
        _conv_stats_kernel,
        grid=grid,
        in_specs=[
            pl.BlockSpec((tm, kp), lambda i: (i, 0)),
            pl.BlockSpec((kp, cp), lambda i: (0, 0)),
        ],
        out_specs=[
            pl.BlockSpec((tm, cp), lambda i: (i, 0)),
            pl.BlockSpec((8, cp), lambda i: (0, 0)),   # revisited accumulator
            pl.BlockSpec((8, cp), lambda i: (0, 0)),   # revisited accumulator
        ],
        out_shape=[
            jax.ShapeDtypeStruct((m_pad, cp), jnp.float32),
            jax.ShapeDtypeStruct((8, cp), jnp.float32),
            jax.ShapeDtypeStruct((8, cp), jnp.float32),
        ],
        compiler_params=pltpu.CompilerParams(
            dimension_semantics=("arbitrary",),        # stats block is revisited
            vmem_limit_bytes=VMEM_LIMIT_BYTES,
        ),
        cost_estimate=pl.CostEstimate(
            flops=2 * m_pad * kp * cp,
            transcendentals=0,
            bytes_accessed=4 * (m_pad * kp + kp * cp + m_pad * cp),
        ),
    )(x_taps, w)

    # ---- tiny host-side BN-statistics finalize (Cp-sized vectors) ----------
    total = jnp.sum(psum, axis=0)
    total_sq = jnp.sum(psq, axis=0)
    mean = total / m_real
    var = jnp.maximum(total_sq / m_real - mean * mean, 0.0)
    inv = jax.lax.rsqrt(var + eps)
    scale = gamma * inv[None, :]                      # (1, Cp)
    shift = beta - mean[None, :] * scale              # (1, Cp)

    # ---- pass 2: normalize (+ residual) + ReLU -----------------------------
    with_res = residual is not None
    in_specs = [
        pl.BlockSpec((tm, cp), lambda i: (i, 0)),
        pl.BlockSpec((1, cp), lambda i: (0, 0)),
        pl.BlockSpec((1, cp), lambda i: (0, 0)),
    ]
    args = [conv_out, scale, shift]
    if with_res:
        in_specs.append(pl.BlockSpec((tm, cp), lambda i: (i, 0)))
        args.append(residual)

    out = pl.pallas_call(
        _make_bn_relu_kernel(with_res),
        grid=grid,
        in_specs=in_specs,
        out_specs=pl.BlockSpec((tm, cp), lambda i: (i, 0)),
        out_shape=jax.ShapeDtypeStruct((m_pad, cp), jnp.float32),
        compiler_params=pltpu.CompilerParams(
            dimension_semantics=("parallel",),         # independent row tiles
            vmem_limit_bytes=VMEM_LIMIT_BYTES,
        ),
        cost_estimate=pl.CostEstimate(
            flops=(4 if with_res else 3) * m_pad * cp,
            transcendentals=0,
            bytes_accessed=4 * ((3 if with_res else 2) * m_pad * cp + 2 * cp),
        ),
    )(*args)
    return out


# --------------------------- host-side glue ----------------------------------
def _round_up(x, m):
    return (x + m - 1) // m * m


def _choose_tm(m):
    return min(TM_MAX, _round_up(m, 8))


def _extract_taps_folded(x_nhwc, stride, k_pad, compute_dtype):
    """Zero-pad spatially by 1 and fold the nine 3x3 tap slabs along the lane
    axis: (N,H,W,C) -> (N*Ho*Wo, pad(9*C, 128)) so the kernel does ONE K=k_pad
    matmul per row tile."""
    n, h, w, c = x_nhwc.shape
    ho = (h - 1) // stride + 1
    wo = (w - 1) // stride + 1
    xp = jnp.pad(x_nhwc, ((0, 0), (1, 1), (1, 1), (0, 0)))
    slabs = []
    for ky in range(3):
        for kx in range(3):
            slab = xp[:, ky:ky + (ho - 1) * stride + 1:stride,
                         kx:kx + (wo - 1) * stride + 1:stride, :]
            slabs.append(slab.reshape(n * ho * wo, c))
    taps = jnp.concatenate(slabs, axis=1)                       # (M, 9*C)
    taps = jnp.pad(taps, ((0, 0), (0, k_pad - 9 * c)))
    return taps.astype(compute_dtype), (n, ho, wo)
# TODO(synk): eliminate this host-side 9x im2col materialization by streaming a
# haloed NHWC block per grid step and doing the 3x3 shifts in-kernel.


def _weight_folded(w_oihw, k_pad, c_pad, compute_dtype):
    """(Cout, Cin, 3, 3) -> (pad(9*Cin,128), pad(Cout,128)); row = (ky*3+kx)*Cin+ci."""
    cout, cin = w_oihw.shape[0], w_oihw.shape[1]
    wf = jnp.transpose(w_oihw, (2, 3, 1, 0)).reshape(9 * cin, cout)
    wf = jnp.pad(wf, ((0, k_pad - 9 * cin), (0, c_pad - cout)))
    return wf.astype(compute_dtype)


def residual_block_forward(x_nchw, params, stride, down_sample, eps=1e-5):
    """Pallas implementation of ResidualBlock.forward.  Input/output: NCHW."""
    w1, g1, b1, w2, g2, b2 = params
    cout, cin = w1.shape[0], w1.shape[1]
    cp = _round_up(cout, LANE)
    k1p = _round_up(9 * cin, LANE)
    k2p = _round_up(9 * cout, LANE)

    x = jnp.transpose(x_nchw, (0, 2, 3, 1))             # NCHW -> NHWC

    # ---- stage 1: conv1 -> bn1 -> relu ----
    taps1, (n, ho, wo) = _extract_taps_folded(x, stride, k1p, COMPUTE_DTYPE)
    m = n * ho * wo
    tm = _choose_tm(m)
    m_pad = _round_up(m, tm)
    taps1 = jnp.pad(taps1, ((0, m_pad - m), (0, 0)))
    g1p = jnp.pad(g1, ((0, 0), (0, cp - cout)))
    b1p = jnp.pad(b1, ((0, 0), (0, cp - cout)))
    z = conv_bn_relu_stage(taps1, _weight_folded(w1, k1p, cp, COMPUTE_DTYPE),
                           g1p, b1p, m, tm, residual=None, eps=eps)

    # ---- shortcut (identity, or IdentityPadding = stride subsample + zero channels) ----
    sc = x[:, ::stride, ::stride, :] if down_sample else x
    sc = sc.reshape(m, cin)
    sc = jnp.pad(sc, ((0, m_pad - m), (0, cp - cin)))    # lane pad == channel zero-pad

    # ---- stage 2: conv2 -> bn2 -> +shortcut -> relu ----
    z_nhwc = z[:m, :cout].reshape(n, ho, wo, cout)
    taps2, _ = _extract_taps_folded(z_nhwc, 1, k2p, COMPUTE_DTYPE)
    taps2 = jnp.pad(taps2, ((0, m_pad - m), (0, 0)))
    g2p = jnp.pad(g2, ((0, 0), (0, cp - cout)))
    b2p = jnp.pad(b2, ((0, 0), (0, cp - cout)))
    out = conv_bn_relu_stage(taps2, _weight_folded(w2, k2p, cp, COMPUTE_DTYPE),
                             g2p, b2p, m, tm, residual=sc, eps=eps)

    out = out[:m, :cout].reshape(n, ho, wo, cout)
    return jnp.transpose(out, (0, 3, 1, 2))              # NHWC -> NCHW


# --------------------------- pure-JAX reference -------------------------------
def residual_block_reference(x, params, stride, down_sample):
    w1, g1, b1, w2, g2, b2 = params
    cout, cin = w1.shape[0], w1.shape[1]
    eps = 1e-5

    def conv(v, w, s):
        return jax.lax.conv_general_dilated(
            v, w, (s, s), ((1, 1), (1, 1)),
            dimension_numbers=("NCHW", "OIHW", "NCHW"),
            precision=jax.lax.Precision.HIGHEST)

    def bn(v, g, b):
        mean = jnp.mean(v, axis=(0, 2, 3), keepdims=True)
        var = jnp.mean((v - mean) ** 2, axis=(0, 2, 3), keepdims=True)
        return (v - mean) * jax.lax.rsqrt(var + eps) * g.reshape(1, -1, 1, 1) \
            + b.reshape(1, -1, 1, 1)

    out = jax.nn.relu(bn(conv(x, w1, stride), g1, b1))
    out = bn(conv(out, w2, 1), g2, b2)
    if down_sample:
        sc = jnp.pad(x, ((0, 0), (0, cout - cin), (0, 0), (0, 0)))
        sc = sc[:, :, ::stride, ::stride]
    else:
        sc = x
    return jax.nn.relu(out + sc)


# ------------------------------------------------------------------------------
def make_params(key, in_channels, out_channels):
    k1, k2, k3, k4 = jax.random.split(key, 4)
    w1 = jax.random.normal(k1, (out_channels, in_channels, 3, 3), jnp.float32) * 0.2
    w2 = jax.random.normal(k2, (out_channels, out_channels, 3, 3), jnp.float32) * 0.2
    g1 = 1.0 + 0.1 * jax.random.normal(k3, (1, out_channels), jnp.float32)
    b1 = 0.1 * jax.random.normal(k4, (1, out_channels), jnp.float32)
    g2 = jnp.ones((1, out_channels), jnp.float32) * 0.9
    b2 = jnp.zeros((1, out_channels), jnp.float32) + 0.05
    return (w1, g1, b1, w2, g2, b2)


if __name__ == "__main__":
    key = jax.random.PRNGKey(0)
    kx1, kx2, kp1, kp2 = jax.random.split(key, 4)

    ok = True

    # Case 1: no downsample (in == out channels, stride 1); M = 512 -> 2 row tiles
    x1 = jax.random.normal(kx1, (2, 4, 16, 16), jnp.float32)
    p1 = make_params(kp1, 4, 4)
    fwd1 = jax.jit(lambda x, p: residual_block_forward(x, p, stride=1, down_sample=False))
    out1 = fwd1(x1, p1)
    jax.block_until_ready(out1)
    ref1 = residual_block_reference(x1, p1, stride=1, down_sample=False)
    ok &= bool(np.allclose(np.asarray(out1), np.asarray(ref1), rtol=2e-3, atol=2e-3))

    # Case 2: downsample (4 -> 8 channels, stride 2, IdentityPadding shortcut)
    x2 = jax.random.normal(kx2, (2, 4, 16, 16), jnp.float32)
    p2 = make_params(kp2, 4, 8)
    fwd2 = jax.jit(lambda x, p: residual_block_forward(x, p, stride=2, down_sample=True))
    out2 = fwd2(x2, p2)
    jax.block_until_ready(out2)
    ref2 = residual_block_reference(x2, p2, stride=2, down_sample=True)
    ok &= bool(np.allclose(np.asarray(out2), np.asarray(ref2), rtol=2e-3, atol=2e-3))

    assert out1.shape == (2, 4, 16, 16) and out2.shape == (2, 8, 8, 8)
    assert ok, "Pallas output does not match JAX reference"
    print("KERNEL_OK")
</pallas_src>

<mosaic_0001>
module attributes {stable_mosaic.version = 11 : i64} {
  func.func @_conv_stats_kernel(%arg0: i32, %arg1: memref<256x128xf32, #tpu.memory_space<vmem>>, %arg2: memref<128x128xf32, #tpu.memory_space<vmem>>, %arg3: memref<256x128xf32, #tpu.memory_space<vmem>>, %arg4: memref<8x128xf32, #tpu.memory_space<vmem>>, %arg5: memref<8x128xf32, #tpu.memory_space<vmem>>) attributes {dimension_semantics = [#tpu.dimension_semantics<arbitrary>], iteration_bounds = array<i64: 2>, scalar_prefetch = 0 : i64, scratch_operands = 0 : i64, tpu.core_type = #tpu.core_type<tc>, window_params = [{transform_indices = @transform_0, window_bounds = array<i64: 256, 128>}, {pipeline_mode = #tpu.pipeline_mode<synchronous>, transform_indices = @transform_1, window_bounds = array<i64: 128, 128>}, {transform_indices = @transform_2, window_bounds = array<i64: 256, 128>}, {pipeline_mode = #tpu.pipeline_mode<synchronous>, transform_indices = @transform_3, window_bounds = array<i64: 8, 128>}, {pipeline_mode = #tpu.pipeline_mode<synchronous>, transform_indices = @transform_4, window_bounds = array<i64: 8, 128>}]} {
    %c0_i32 = arith.constant 0 : i32
    %0 = arith.cmpi eq, %arg0, %c0_i32 : i32
    %1 = arith.extui %0 : i1 to i32
    %c0_i32_0 = arith.constant 0 : i32
    %2 = arith.cmpi ne, %1, %c0_i32_0 : i32
    scf.if %2 {
      %cst_16 = arith.constant 0.000000e+00 : f32
      %17 = vector.broadcast %cst_16 : f32 to vector<8x128xf32>
      %c0_17 = arith.constant 0 : index
      %c0_18 = arith.constant 0 : index
      %18 = vector.load %arg4[%c0_17, %c0_18] : memref<8x128xf32, #tpu.memory_space<vmem>>, vector<8x128xf32>
      tpu.vector_store %arg4[%c0_17, %c0_18], %17 {strides = array<i32>} : memref<8x128xf32, #tpu.memory_space<vmem>>, vector<8x128xf32>,
      %cst_19 = arith.constant 0.000000e+00 : f32
      %19 = vector.broadcast %cst_19 : f32 to vector<8x128xf32>
      %c0_20 = arith.constant 0 : index
      %c0_21 = arith.constant 0 : index
      %20 = vector.load %arg5[%c0_20, %c0_21] : memref<8x128xf32, #tpu.memory_space<vmem>>, vector<8x128xf32>
      tpu.vector_store %arg5[%c0_20, %c0_21], %19 {strides = array<i32>} : memref<8x128xf32, #tpu.memory_space<vmem>>, vector<8x128xf32>,
    } else {
    }
    %c0 = arith.constant 0 : index
    %c0_1 = arith.constant 0 : index
    %3 = vector.load %arg1[%c0, %c0_1] : memref<256x128xf32, #tpu.memory_space<vmem>>, vector<256x128xf32>
    %c0_2 = arith.constant 0 : index
    %c0_3 = arith.constant 0 : index
    %4 = vector.load %arg2[%c0_2, %c0_3] : memref<128x128xf32, #tpu.memory_space<vmem>>, vector<128x128xf32>
    %cst = arith.constant dense<0.000000e+00> : vector<256x128xf32>
    %5 = tpu.matmul %3, %4, %cst {dimension_numbers = #tpu.dot_dimension_numbers<[1], [0], [0], [1], [0, 0, 1, 1], [], []>} : vector<256x128xf32>, vector<128x128xf32>, vector<256x128xf32> -> vector<256x128xf32>
    %c0_4 = arith.constant 0 : index
    %c0_5 = arith.constant 0 : index
    %6 = vector.load %arg3[%c0_4, %c0_5] : memref<256x128xf32, #tpu.memory_space<vmem>>, vector<256x128xf32>
    tpu.vector_store %arg3[%c0_4, %c0_5], %5 {strides = array<i32>} : memref<256x128xf32, #tpu.memory_space<vmem>>, vector<256x128xf32>,
    %7 = vector.shape_cast %5 : vector<256x128xf32> to vector<32x8x128xf32>
    %c0_6 = arith.constant 0 : index
    %c0_7 = arith.constant 0 : index
    %8 = vector.load %arg4[%c0_6, %c0_7] : memref<8x128xf32, #tpu.memory_space<vmem>>, vector<8x128xf32>
    %cst_8 = arith.constant dense<0.000000e+00> : vector<8x128xf32>
    %9 = vector.multi_reduction <add>, %7, %cst_8 [0] : vector<32x8x128xf32> to vector<8x128xf32>
    %10 = arith.addf %8, %9 : vector<8x128xf32>
    %c0_9 = arith.constant 0 : index
    %c0_10 = arith.constant 0 : index
    %11 = vector.load %arg4[%c0_9, %c0_10] : memref<8x128xf32, #tpu.memory_space<vmem>>, vector<8x128xf32>
    tpu.vector_store %arg4[%c0_9, %c0_10], %10 {strides = array<i32>} : memref<8x128xf32, #tpu.memory_space<vmem>>, vector<8x128xf32>,
    %c0_11 = arith.constant 0 : index
    %c0_12 = arith.constant 0 : index
    %12 = vector.load %arg5[%c0_11, %c0_12] : memref<8x128xf32, #tpu.memory_space<vmem>>, vector<8x128xf32>
    %13 = arith.mulf %7, %7 : vector<32x8x128xf32>
    %cst_13 = arith.constant dense<0.000000e+00> : vector<8x128xf32>
    %14 = vector.multi_reduction <add>, %13, %cst_13 [0] : vector<32x8x128xf32> to vector<8x128xf32>
    %15 = arith.addf %12, %14 : vector<8x128xf32>
    %c0_14 = arith.constant 0 : index
    %c0_15 = arith.constant 0 : index
    %16 = vector.load %arg5[%c0_14, %c0_15] : memref<8x128xf32, #tpu.memory_space<vmem>>, vector<8x128xf32>
    tpu.vector_store %arg5[%c0_14, %c0_15], %15 {strides = array<i32>} : memref<8x128xf32, #tpu.memory_space<vmem>>, vector<8x128xf32>,
    return
  }
  func.func @transform_0(%arg0: i32) -> (i32, i32) {
    %c0_i32 = arith.constant 0 : i32
    %c0_i32_0 = arith.constant 0 : i32
    return %arg0, %c0_i32 : i32, i32
  }
  func.func @transform_1(%arg0: i32) -> (i32, i32) {
    %c0_i32 = arith.constant 0 : i32
    %c0_i32_0 = arith.constant 0 : i32
    %c0_i32_1 = arith.constant 0 : i32
    return %c0_i32, %c0_i32_0 : i32, i32
  }
  func.func @transform_2(%arg0: i32) -> (i32, i32) {
    %c0_i32 = arith.constant 0 : i32
    %c0_i32_0 = arith.constant 0 : i32
    return %arg0, %c0_i32 : i32, i32
  }
  func.func @transform_3(%arg0: i32) -> (i32, i32) {
    %c0_i32 = arith.constant 0 : i32
    %c0_i32_0 = arith.constant 0 : i32
    %c0_i32_1 = arith.constant 0 : i32
    return %c0_i32, %c0_i32_0 : i32, i32
  }
  func.func @transform_4(%arg0: i32) -> (i32, i32) {
    %c0_i32 = arith.constant 0 : i32
    %c0_i32_0 = arith.constant 0 : i32
    %c0_i32_1 = arith.constant 0 : i32
    return %c0_i32, %c0_i32_0 : i32, i32
  }
}

module attributes {stable_mosaic.version = 11 : i64} {
  func.func @kernel(%arg0: i32, %arg1: memref<256x128xf32, #tpu.memory_space<vmem>>, %arg2: memref<1x128xf32, #tpu.memory_space<vmem>>, %arg3: memref<1x128xf32, #tpu.memory_space<vmem>>, %arg4: memref<256x128xf32, #tpu.memory_space<vmem>>) attributes {dimension_semantics = [#tpu.dimension_semantics<parallel>], iteration_bounds = array<i64: 2>, scalar_prefetch = 0 : i64, scratch_operands = 0 : i64, tpu.core_type = #tpu.core_type<tc>, window_params = [{transform_indices = @transform_0, window_bounds = array<i64: 256, 128>}, {pipeline_mode = #tpu.pipeline_mode<synchronous>, transform_indices = @transform_1, window_bounds = array<i64: 1, 128>}, {pipeline_mode = #tpu.pipeline_mode<synchronous>, transform_indices = @transform_2, window_bounds = array<i64: 1, 128>}, {transform_indices = @transform_3, window_bounds = array<i64: 256, 128>}]} {
    %c0 = arith.constant 0 : index
    %c0_0 = arith.constant 0 : index
    %0 = vector.load %arg1[%c0, %c0_0] : memref<256x128xf32, #tpu.memory_space<vmem>>, vector<256x128xf32>
    %c0_1 = arith.constant 0 : index
    %c0_2 = arith.constant 0 : index
    %1 = vector.load %arg2[%c0_1, %c0_2] : memref<1x128xf32, #tpu.memory_space<vmem>>, vector<1x128xf32>
    %2 = vector.broadcast %1 : vector<1x128xf32> to vector<256x128xf32>
    %3 = arith.mulf %0, %2 : vector<256x128xf32>
    %c0_3 = arith.constant 0 : index
    %c0_4 = arith.constant 0 : index
    %4 = vector.load %arg3[%c0_3, %c0_4] : memref<1x128xf32, #tpu.memory_space<vmem>>, vector<1x128xf32>
    %5 = vector.broadcast %4 : vector<1x128xf32> to vector<256x128xf32>
    %6 = arith.addf %3, %5 : vector<256x128xf32>
    %cst = arith.constant 0.000000e+00 : f32
    %7 = vector.broadcast %cst : f32 to vector<256x128xf32>
    %8 = arith.maximumf %6, %7 : vector<256x128xf32>
    %c0_5 = arith.constant 0 : index
    %c0_6 = arith.constant 0 : index
    %9 = vector.load %arg4[%c0_5, %c0_6] : memref<256x128xf32, #tpu.memory_space<vmem>>, vector<256x128xf32>
    tpu.vector_store %arg4[%c0_5, %c0_6], %8 {strides = array<i32>} : memref<256x128xf32, #tpu.memory_space<vmem>>, vector<256x128xf32>,
    return
  }
  func.func @transform_0(%arg0: i32) -> (i32, i32) {
    %c0_i32 = arith.constant 0 : i32
    %c0_i32_0 = arith.constant 0 : i32
    return %arg0, %c0_i32 : i32, i32
  }
  func.func @transform_1(%arg0: i32) -> (i32, i32) {
    %c0_i32 = arith.constant 0 : i32
    %c0_i32_0 = arith.constant 0 : i32
    %c0_i32_1 = arith.constant 0 : i32
    return %c0_i32, %c0_i32_0 : i32, i32
  }
  func.func @transform_2(%arg0: i32) -> (i32, i32) {
    %c0_i32 = arith.constant 0 : i32
    %c0_i32_0 = arith.constant 0 : i32
    %c0_i32_1 = arith.constant 0 : i32
    return %c0_i32, %c0_i32_0 : i32, i32
  }
  func.func @transform_3(%arg0: i32) -> (i32, i32) {
    %c0_i32 = arith.constant 0 : i32
    %c0_i32_0 = arith.constant 0 : i32
    return %arg0, %c0_i32 : i32, i32
  }
}

module attributes {stable_mosaic.version = 11 : i64} {
  func.func @kernel(%arg0: i32, %arg1: memref<256x128xf32, #tpu.memory_space<vmem>>, %arg2: memref<1x128xf32, #tpu.memory_space<vmem>>, %arg3: memref<1x128xf32, #tpu.memory_space<vmem>>, %arg4: memref<256x128xf32, #tpu.memory_space<vmem>>, %arg5: memref<256x128xf32, #tpu.memory_space<vmem>>) attributes {dimension_semantics = [#tpu.dimension_semantics<parallel>], iteration_bounds = array<i64: 2>, scalar_prefetch = 0 : i64, scratch_operands = 0 : i64, tpu.core_type = #tpu.core_type<tc>, window_params = [{transform_indices = @transform_0, window_bounds = array<i64: 256, 128>}, {pipeline_mode = #tpu.pipeline_mode<synchronous>, transform_indices = @transform_1, window_bounds = array<i64: 1, 128>}, {pipeline_mode = #tpu.pipeline_mode<synchronous>, transform_indices = @transform_2, window_bounds = array<i64: 1, 128>}, {transform_indices = @transform_3, window_bounds = array<i64: 256, 128>}, {transform_indices = @transform_4, window_bounds = array<i64: 256, 128>}]} {
    %c0 = arith.constant 0 : index
    %c0_0 = arith.constant 0 : index
    %0 = vector.load %arg1[%c0, %c0_0] : memref<256x128xf32, #tpu.memory_space<vmem>>, vector<256x128xf32>
    %c0_1 = arith.constant 0 : index
    %c0_2 = arith.constant 0 : index
    %1 = vector.load %arg2[%c0_1, %c0_2] : memref<1x128xf32, #tpu.memory_space<vmem>>, vector<1x128xf32>
    %2 = vector.broadcast %1 : vector<1x128xf32> to vector<256x128xf32>
    %3 = arith.mulf %0, %2 : vector<256x128xf32>
    %c0_3 = arith.constant 0 : index
    %c0_4 = arith.constant 0 : index
    %4 = vector.load %arg3[%c0_3, %c0_4] : memref<1x128xf32, #tpu.memory_space<vmem>>, vector<1x128xf32>
    %5 = vector.broadcast %4 : vector<1x128xf32> to vector<256x128xf32>
    %6 = arith.addf %3, %5 : vector<256x128xf32>
    %c0_5 = arith.constant 0 : index
    %c0_6 = arith.constant 0 : index
    %7 = vector.load %arg4[%c0_5, %c0_6] : memref<256x128xf32, #tpu.memory_space<vmem>>, vector<256x128xf32>
    %8 = arith.addf %6, %7 : vector<256x128xf32>
    %cst = arith.constant 0.000000e+00 : f32
    %9 = vector.broadcast %cst : f32 to vector<256x128xf32>
    %10 = arith.maximumf %8, %9 : vector<256x128xf32>
    %c0_7 = arith.constant 0 : index
    %c0_8 = arith.constant 0 : index
    %11 = vector.load %arg5[%c0_7, %c0_8] : memref<256x128xf32, #tpu.memory_space<vmem>>, vector<256x128xf32>
    tpu.vector_store %arg5[%c0_7, %c0_8], %10 {strides = array<i32>} : memref<256x128xf32, #tpu.memory_space<vmem>>, vector<256x128xf32>,
    return
  }
  func.func @transform_0(%arg0: i32) -> (i32, i32) {
    %c0_i32 = arith.constant 0 : i32
    %c0_i32_0 = arith.constant 0 : i32
    return %arg0, %c0_i32 : i32, i32
  }
  func.func @transform_1(%arg0: i32) -> (i32, i32) {
    %c0_i32 = arith.constant 0 : i32
    %c0_i32_0 = arith.constant 0 : i32
    %c0_i32_1 = arith.constant 0 : i32
    return %c0_i32, %c0_i32_0 : i32, i32
  }
  func.func @transform_2(%arg0: i32) -> (i32, i32) {
    %c0_i32 = arith.constant 0 : i32
    %c0_i32_0 = arith.constant 0 : i32
    %c0_i32_1 = arith.constant 0 : i32
    return %c0_i32, %c0_i32_0 : i32, i32
  }
  func.func @transform_3(%arg0: i32) -> (i32, i32) {
    %c0_i32 = arith.constant 0 : i32
    %c0_i32_0 = arith.constant 0 : i32
    return %arg0, %c0_i32 : i32, i32
  }
  func.func @transform_4(%arg0: i32) -> (i32, i32) {
    %c0_i32 = arith.constant 0 : i32
    %c0_i32_0 = arith.constant 0 : i32
    return %arg0, %c0_i32 : i32, i32
  }
}

</mosaic_0001>

<llo_original>
// kernel: _lambda_.5
$region0: #{_lambda_.5}
  #allocation0 [shape = 'u32[]', space=smem, size = 0x4, offset = 0x4, fixed_abs, tag = 'smem constant byte address 0x4 - core index']
  #allocation1 [shape = 'u32[72,128]{1,0:T(1,128)}', space=vmem, size = 0x9000, scoped, tag = 'internal scratch']
  %s0 = inlined_call_operand.vmem [shape: f32[512,128], index: 0, kind: input, shape index: {}]
  %s1 = inlined_call_operand.vmem [shape: f32[1,128], index: 1, kind: input, shape index: {}]
  %s2 = inlined_call_operand.vmem [shape: f32[1,128], index: 2, kind: input, shape index: {}]
  %s3 = inlined_call_operand.vmem [shape: f32[512,128], index: 3, kind: output, shape index: {}]
  %s4 = sld [smem:[#allocation0]]
  $region45: #{_lambda_.5} parent=0
    _
  %s6 = ssub.s32 1, %s4
  %s7 = scalar_select 0, %s6, %s4
  loop: start=0, step=1, limit=4
  $region2: #{_lambda_.5} parent=0 // loop_pre_header
    _
  $region3: #{_lambda_.5} parent=0 // loop_header
    %s9 = sphi 0, %s13
    %p10 = scmp.ge.s32.totalorder %s9, 4
    %s19 = sphi 0, %s21
    %s22 = sphi 0, %s19
    %s23 = sphi 0, %s22
    %s39 = sphi 0, %s23
    %s43 = sphi 0, %s43
    %s45 = sphi 0, %s43
    %s46 = sphi 0, %s45
    %s60 = sphi 0, %s46
    %s64 = sphi 0, %s64
    %s66 = sphi 0, %s64
    %s67 = sphi 0, %s66
    %s81 = sphi 0, %s67
    %s87 = sphi 0, %s89
    %s90 = sphi 0, %s87
    %s91 = sphi 0, %s90
    %s107 = sphi 0, %s91
  $region4: #{_lambda_.5} parent=0 // loop_header_branch
    %12 = sbr.rel (%p10) target = $region8
  $region5: #{_lambda_.5} parent=0 // loop_body
    %s14 = ssub.s32 %s9, 1
    %s15 = ssub.s32 %s9, 2
    %s16 = sadd.s32 %s9, 1
    %s17 = ssub.s32 %s9, %s16
    %p18 = scmp.eq.s32.totalorder %s17, 0
    %s20 = sadd.s32 %s19, 1
    %s21 = scalar_select %p18, %s19, %s20
    %p24 = pneg %p18
    %p25 = scmp.eq.s32.totalorder %s9, 1
    %p26 = por %p24, %p25
    %p27 = scmp.ne.s32.totalorder %s19, %s22
    %p28 = scmp.eq.s32.totalorder %s9, 0
    %p29 = por %p27, %p28
    %p30 = scmp.ne.s32.totalorder %s19, %s22
    %p31 = scmp.eq.s32.totalorder %s14, 1
    %p32 = por %p30, %p31
    %p33 = scmp.ne.s32.totalorder %s22, %s23
    %p34 = scmp.eq.s32.totalorder %s14, 0
    %p35 = por %p33, %p34
    %p36 = scmp.ne.s32.totalorder %s22, %s23
    %p37 = scmp.eq.s32.totalorder %s15, 1
    %p38 = por %p36, %p37
    %p40 = scmp.ne.s32.totalorder %s23, %s39
    %p41 = scmp.eq.s32.totalorder %s15, 0
    %p42 = por %p40, %p41
    %s44 = sadd.s32 %s43, 1
    %p47 = scmp.eq.s32.totalorder %s9, 1
    %p48 = scmp.ne.s32.totalorder %s43, %s45
    %p49 = scmp.eq.s32.totalorder %s9, 0
    %p50 = por %p48, %p49
    %p51 = scmp.ne.s32.totalorder %s43, %s45
    %p52 = scmp.eq.s32.totalorder %s14, 1
    %p53 = por %p51, %p52
    %p54 = scmp.ne.s32.totalorder %s45, %s46
    %p55 = scmp.eq.s32.totalorder %s14, 0
    %p56 = por %p54, %p55
    %p57 = scmp.ne.s32.totalorder %s45, %s46
    %p58 = scmp.eq.s32.totalorder %s15, 1
    %p59 = por %p57, %p58
    %p61 = scmp.ne.s32.totalorder %s46, %s60
    %p62 = scmp.eq.s32.totalorder %s15, 0
    %p63 = por %p61, %p62
    %s65 = sadd.s32 %s64, 1
    %p68 = scmp.eq.s32.totalorder %s9, 1
    %p69 = scmp.ne.s32.totalorder %s64, %s66
    %p70 = scmp.eq.s32.totalorder %s9, 0
    %p71 = por %p69, %p70
    %p72 = scmp.ne.s32.totalorder %s64, %s66
    %p73 = scmp.eq.s32.totalorder %s14, 1
    %p74 = por %p72, %p73
    %p75 = scmp.ne.s32.totalorder %s66, %s67
    %p76 = scmp.eq.s32.totalorder %s14, 0
    %p77 = por %p75, %p76
    %p78 = scmp.ne.s32.totalorder %s66, %s67
    %p79 = scmp.eq.s32.totalorder %s15, 1
    %p80 = por %p78, %p79
    %p82 = scmp.ne.s32.totalorder %s67, %s81
    %p83 = scmp.eq.s32.totalorder %s15, 0
    %p84 = por %p82, %p83
    %s85 = ssub.s32 %s9, %s16
    %p86 = scmp.eq.s32.totalorder %s85, 0
    %s88 = sadd.s32 %s87, 1
    %s89 = scalar_select %p86, %s87, %s88
    %p92 = pneg %p86
    %p93 = scmp.eq.s32.totalorder %s9, 1
    %p94 = por %p92, %p93
    %p95 = scmp.ne.s32.totalorder %s87, %s90
    %p96 = scmp.eq.s32.totalorder %s9, 0
    %p97 = por %p95, %p96
    %p98 = scmp.ne.s32.totalorder %s87, %s90
    %p99 = scmp.eq.s32.totalorder %s14, 1
    %p100 = por %p98, %p99
    %p101 = scmp.ne.s32.totalorder %s90, %s91
    %p102 = scmp.eq.s32.totalorder %s14, 0
    %p103 = por %p101, %p102
    %p104 = scmp.ne.s32.totalorder %s90, %s91
    %p105 = scmp.eq.s32.totalorder %s15, 1
    %p106 = por %p104, %p105
    %p108 = scmp.ne.s32.totalorder %s91, %s107
    %p109 = scmp.eq.s32.totalorder %s15, 0
    %p110 = por %p108, %p109
    %p111 = scmp.le.s32.totalorder 1, %s9
    %p112 = scmp.lt.s32.totalorder %s9, 3
    %p113 = pnand %p111, %p112
    %p114 = pneg %p113
    // Predicated region
    $region9: #{_lambda_.5} parent=5 // pred_check
      _
    $region10: #{_lambda_.5} parent=5 // pred_check_branch
      %116 = sbr.rel (%p113) target = $region12
    $region11: #{_lambda_.5} parent=5 // pred_region
      %s117 = ssub.s32 %s9, 1
      // Predicated region
      $region13: #{_lambda_.5} parent=11 // pred_check
        %p118 = pneg %p56
      $region14: #{_lambda_.5} parent=11 // pred_check_branch
        %120 = sbr.rel (%p118) target = $region16
      $region15: #{_lambda_.5} parent=11 // pred_region
        _
      $region16: #{_lambda_.5} parent=11 // pred_fallthru
        _
      // Predicated region
      $region17: #{_lambda_.5} parent=11 // pred_check
        %p121 = pneg %p77
      $region18: #{_lambda_.5} parent=11 // pred_check_branch
        %123 = sbr.rel (%p121) target = $region20
      $region19: #{_lambda_.5} parent=11 // pred_region
        _
      $region20: #{_lambda_.5} parent=11 // pred_fallthru
        _
    $region12: #{_lambda_.5} parent=5 // pred_fallthru
      _
    %p124 = scmp.lt.s32.totalorder %s9, 2
    // Predicated region
    $region21: #{_lambda_.5} parent=5 // pred_check
      %p125 = pneg %p124
    $region22: #{_lambda_.5} parent=5 // pred_check_branch
      %127 = sbr.rel (%p125) target = $region24
    $region23: #{_lambda_.5} parent=5 // pred_region
      // Predicated region
      $region25: #{_lambda_.5} parent=23 // pred_check
        %p128 = pneg %p29
      $region26: #{_lambda_.5} parent=23 // pred_check_branch
        %130 = sbr.rel (%p128) target = $region28
      $region27: #{_lambda_.5} parent=23 // pred_region
        %s131 = smul.u32 32, %s9
        %p132 = scmp.lt.s32.totalorder %s131, 63
        %s133 = scalar_select %p132, %s131, 63
        %s134 = smul.addr %s133, 8
        %s135 = scalar_lea.vmem %s0, %s134
        %s136 = smul.u32 32, %s9
      $region28: #{_lambda_.5} parent=23 // pred_fallthru
        _
    $region24: #{_lambda_.5} parent=5 // pred_fallthru
      _
    %p137 = scmp.le.s32.totalorder 1, %s9
    %p138 = scmp.lt.s32.totalorder %s9, 3
    %p139 = pnand %p137, %p138
    %p140 = pneg %p139
    // Predicated region
    $region29: #{_lambda_.5} parent=5 // pred_check
      _
    $region30: #{_lambda_.5} parent=5 // pred_check_branch
      %142 = sbr.rel (%p139) target = $region32
    $region31: #{_lambda_.5} parent=5 // pred_region
      %s143 = ssub.s32 %s9, 1
      %s144 = smul.u32 32, %s14
      %p145 = scmp.lt.s32.totalorder %s144, 63
      %s146 = scalar_select %p145, %s144, 63
      %s147 = smul.addr %s146, 8
      %s148 = scalar_lea.vmem %s0, %s147
      %p149 = pneg %p35
      %p150 = pneg %p32
      %p151 = pneg %p56
      %p152 = pneg %p53
      %p153 = pneg %p77
      %p154 = pneg %p74
      %p155 = pneg %p103
      %p156 = pneg %p100
      %s157 = smul.u32 32, %s14
      %p158 = scmp.lt.s32.totalorder %s157, 63
      %s159 = scalar_select %p158, %s157, 63
      %s160 = smul.addr %s159, 8
      %s161 = scalar_lea.vmem %s3, %s160
      %s162 = smul.u32 32, %s14
      %p163 = scmp.lt.s32.totalorder %s162, 63
      %s164 = scalar_select %p163, %s162, 63
      %s165 = smul.addr %s164, 8
      %s166 = scalar_lea.vmem %s0, %s165
      %s167 = smul.u32 32, %s14
      %s168 = smul.u32 32, %s14
      %p169 = scmp.lt.s32.totalorder %s168, 63
      %s170 = scalar_select %p169, %s168, 63
      %s171 = smul.addr %s170, 8
      %s172 = scalar_lea.vmem %s3, %s171
      %s173 = smul.u32 32, %s14
      %v174 = vld [vmem:[%s166] sm:$0xff]
      %v175 = vld [vmem:[%s166 + $0x8] sm:$0xff]
      %v176 = vld [vmem:[%s166 + $0x10] sm:$0xff]
      %v177 = vld [vmem:[%s166 + $0x18] sm:$0xff]
      %v178 = vld [vmem:[%s166 + $0x20] sm:$0xff]
      %v179 = vld [vmem:[%s166 + $0x28] sm:$0xff]
      %v180 = vld [vmem:[%s166 + $0x30] sm:$0xff]
      %v181 = vld [vmem:[%s166 + $0x38] sm:$0xff]
      %v182 = vld [vmem:[%s166 + $0x40] sm:$0xff]
      %v183 = vld [vmem:[%s166 + $0x48] sm:$0xff]
      %v184 = vld [vmem:[%s166 + $0x50] sm:$0xff]
      %v185 = vld [vmem:[%s166 + $0x58] sm:$0xff]
      %v186 = vld [vmem:[%s166 + $0x60] sm:$0xff]
      %v187 = vld [vmem:[%s166 + $0x68] sm:$0xff]
      %v188 = vld [vmem:[%s166 + $0x70] sm:$0xff]
      %v189 = vld [vmem:[%s166 + $0x78] sm:$0xff]
      %v190 = vld [vmem:[%s166 + $0x80] sm:$0xff]
      %v191 = vld [vmem:[%s166 + $0x88] sm:$0xff]
      %v192 = vld [vmem:[%s166 + $0x90] sm:$0xff]
      %v193 = vld [vmem:[%s166 + $0x98] sm:$0xff]
      %v194 = vld [vmem:[%s166 + $0xa0] sm:$0xff]
      %v195 = vld [vmem:[%s166 + $0xa8] sm:$0xff]
      %v196 = vld [vmem:[%s166 + $0xb0] sm:$0xff]
      %v197 = vld [vmem:[%s166 + $0xb8] sm:$0xff]
      %v198 = vld [vmem:[%s166 + $0xc0] sm:$0xff]
      %v199 = vld [vmem:[%s166 + $0xc8] sm:$0xff]
      %v200 = vld [vmem:[%s166 + $0xd0] sm:$0xff]
      %v201 = vld [vmem:[%s166 + $0xd8] sm:$0xff]
      %v202 = vld [vmem:[%s166 + $0xe0] sm:$0xff]
      %v203 = vld [vmem:[%s166 + $0xe8] sm:$0xff]
      %v204 = vld [vmem:[%s166 + $0xf0] sm:$0xff]
      %v205 = vld [vmem:[%s166 + $0xf8] sm:$0xff]
      %v206 = vld [vmem:[%s1] sm:$0x1]
      %v208 = vperm.slane %v206, 0
      %v210 = vmul.f32 %v174, %v208
      %v211 = vmul.f32 %v175, %v208
      %v212 = vmul.f32 %v176, %v208
      %v213 = vmul.f32 %v177, %v208
      %v214 = vmul.f32 %v178, %v208
      %v215 = vmul.f32 %v179, %v208
      %v216 = vmul.f32 %v180, %v208
      %v217 = vmul.f32 %v181, %v208
      %v218 = vmul.f32 %v182, %v208
      %v219 = vmul.f32 %v183, %v208
      %v220 = vmul.f32 %v184, %v208
      %v221 = vmul.f32 %v185, %v208
      %v222 = vmul.f32 %v186, %v208
      %v223 = vmul.f32 %v187, %v208
      %v224 = vmul.f32 %v188, %v208
      %v225 = vmul.f32 %v189, %v208
      %v226 = vmul.f32 %v190, %v208
      %v227 = vmul.f32 %v191, %v208
      %v228 = vmul.f32 %v192, %v208
      %v229 = vmul.f32 %v193, %v208
      %v230 = vmul.f32 %v194, %v208
      %v231 = vmul.f32 %v195, %v208
      %v232 = vmul.f32 %v196, %v208
      %v233 = vmul.f32 %v197, %v208
      %v234 = vmul.f32 %v198, %v208
      %v235 = vmul.f32 %v199, %v208
      %v236 = vmul.f32 %v200, %v208
      %v237 = vmul.f32 %v201, %v208
      %v238 = vmul.f32 %v202, %v208
      %v239 = vmul.f32 %v203, %v208
      %v240 = vmul.f32 %v204, %v208
      %v241 = vmul.f32 %v205, %v208
      %v242 = vld [vmem:[%s2] sm:$0x1]
      %v244 = vperm.slane %v242, 0
      %v246 = vadd.f32 %v210, %v244
      %v247 = vadd.f32 %v211, %v244
      %v248 = vadd.f32 %v212, %v244
      %v249 = vadd.f32 %v213, %v244
      %v250 = vadd.f32 %v214, %v244
      %v251 = vadd.f32 %v215, %v244
      %v252 = vadd.f32 %v216, %v244
      %v253 = vadd.f32 %v217, %v244
      %v254 = vadd.f32 %v218, %v244
      %v255 = vadd.f32 %v219, %v244
      %v256 = vadd.f32 %v220, %v244
      %v257 = vadd.f32 %v221, %v244
      %v258 = vadd.f32 %v222, %v244
      %v259 = vadd.f32 %v223, %v244
      %v260 = vadd.f32 %v224, %v244
      %v261 = vadd.f32 %v225, %v244
      %v262 = vadd.f32 %v226, %v244
      %v263 = vadd.f32 %v227, %v244
      %v264 = vadd.f32 %v228, %v244
      %v265 = vadd.f32 %v229, %v244
      %v266 = vadd.f32 %v230, %v244
      %v267 = vadd.f32 %v231, %v244
      %v268 = vadd.f32 %v232, %v244
      %v269 = vadd.f32 %v233, %v244
      %v270 = vadd.f32 %v234, %v244
      %v271 = vadd.f32 %v235, %v244
      %v272 = vadd.f32 %v236, %v244
      %v273 = vadd.f32 %v237, %v244
      %v274 = vadd.f32 %v238, %v244
      %v275 = vadd.f32 %v239, %v244
      %v276 = vadd.f32 %v240, %v244
      %v277 = vadd.f32 %v241, %v244
      %v278 = vmax.f32 %v246, 0.0
      %v279 = vmax.f32 %v247, 0.0
      %v280 = vmax.f32 %v248, 0.0
      %v281 = vmax.f32 %v249, 0.0
      %v282 = vmax.f32 %v250, 0.0
      %v283 = vmax.f32 %v251, 0.0
      %v284 = vmax.f32 %v252, 0.0
      %v285 = vmax.f32 %v253, 0.0
      %v286 = vmax.f32 %v254, 0.0
      %v287 = vmax.f32 %v255, 0.0
      %v288 = vmax.f32 %v256, 0.0
      %v289 = vmax.f32 %v257, 0.0
      %v290 = vmax.f32 %v258, 0.0
      %v291 = vmax.f32 %v259, 0.0
      %v292 = vmax.f32 %v260, 0.0
      %v293 = vmax.f32 %v261, 0.0
      %v294 = vmax.f32 %v262, 0.0
      %v295 = vmax.f32 %v263, 0.0
      %v296 = vmax.f32 %v264, 0.0
      %v297 = vmax.f32 %v265, 0.0
      %v298 = vmax.f32 %v266, 0.0
      %v299 = vmax.f32 %v267, 0.0
      %v300 = vmax.f32 %v268, 0.0
      %v301 = vmax.f32 %v269, 0.0
      %v302 = vmax.f32 %v270, 0.0
      %v303 = vmax.f32 %v271, 0.0
      %v304 = vmax.f32 %v272, 0.0
      %v305 = vmax.f32 %v273, 0.0
      %v306 = vmax.f32 %v274, 0.0
      %v307 = vmax.f32 %v275, 0.0
      %v308 = vmax.f32 %v276, 0.0
      %v309 = vmax.f32 %v277, 0.0
      %310 = vst [vmem:[%s172] sm:$0xff] %v278
      %311 = vst [vmem:[%s172 + $0x8] sm:$0xff] %v279
      %312 = vst [vmem:[%s172 + $0x10] sm:$0xff] %v280
      %313 = vst [vmem:[%s172 + $0x18] sm:$0xff] %v281
      %314 = vst [vmem:[%s172 + $0x20] sm:$0xff] %v282
      %315 = vst [vmem:[%s172 + $0x28] sm:$0xff] %v283
      %316 = vst [vmem:[%s172 + $0x30] sm:$0xff] %v284
      %317 = vst [vmem:[%s172 + $0x38] sm:$0xff] %v285
      %318 = vst [vmem:[%s172 + $0x40] sm:$0xff] %v286
      %319 = vst [vmem:[%s172 + $0x48] sm:$0xff] %v287
      %320 = vst [vmem:[%s172 + $0x50] sm:$0xff] %v288
      %321 = vst [vmem:[%s172 + $0x58] sm:$0xff] %v289
      %322 = vst [vmem:[%s172 + $0x60] sm:$0xff] %v290
      %323 = vst [vmem:[%s172 + $0x68] sm:$0xff] %v291
      %324 = vst [vmem:[%s172 + $0x70] sm:$0xff] %v292
      %325 = vst [vmem:[%s172 + $0x78] sm:$0xff] %v293
      %326 = vst [vmem:[%s172 + $0x80] sm:$0xff] %v294
      %327 = vst [vmem:[%s172 + $0x88] sm:$0xff] %v295
      %328 = vst [vmem:[%s172 + $0x90] sm:$0xff] %v296
      %329 = vst [vmem:[%s172 + $0x98] sm:$0xff] %v297
      %330 = vst [vmem:[%s172 + $0xa0] sm:$0xff] %v298
      %331 = vst [vmem:[%s172 + $0xa8] sm:$0xff] %v299
      %332 = vst [vmem:[%s172 + $0xb0] sm:$0xff] %v300
      %333 = vst [vmem:[%s172 + $0xb8] sm:$0xff] %v301
      %334 = vst [vmem:[%s172 + $0xc0] sm:$0xff] %v302
      %335 = vst [vmem:[%s172 + $0xc8] sm:$0xff] %v303
      %336 = vst [vmem:[%s172 + $0xd0] sm:$0xff] %v304
      %337 = vst [vmem:[%s172 + $0xd8] sm:$0xff] %v305
      %338 = vst [vmem:[%s172 + $0xe0] sm:$0xff] %v306
      %339 = vst [vmem:[%s172 + $0xe8] sm:$0xff] %v307
      %340 = vst [vmem:[%s172 + $0xf0] sm:$0xff] %v308
      %341 = vst [vmem:[%s172 + $0xf8] sm:$0xff] %v309
      %s342 = smul.u32 32, %s14
      %p343 = scmp.lt.s32.totalorder %s342, 63
      %s344 = scalar_select %p343, %s342, 63
      %s345 = smul.addr %s344, 8
      %s346 = scalar_lea.vmem %s3, %s345
      // Predicated region
      $region33: #{_lambda_.5} parent=31 // pred_check
        %p347 = pneg %p100
      $region34: #{_lambda_.5} parent=31 // pred_check_branch
        %349 = sbr.rel (%p347) target = $region36
      $region35: #{_lambda_.5} parent=31 // pred_region
        %s350 = smul.u32 32, %s14
      $region36: #{_lambda_.5} parent=31 // pred_fallthru
        _
    $region32: #{_lambda_.5} parent=5 // pred_fallthru
      _
    %p351 = scmp.le.s32.totalorder 2, %s9
    // Predicated region
    $region37: #{_lambda_.5} parent=5 // pred_check
      %p352 = pneg %p351
    $region38: #{_lambda_.5} parent=5 // pred_check_branch
      %354 = sbr.rel (%p352) target = $region40
    $region39: #{_lambda_.5} parent=5 // pred_region
      %s355 = ssub.s32 %s9, 2
      // Predicated region
      $region41: #{_lambda_.5} parent=39 // pred_check
        %p356 = pneg %p106
      $region42: #{_lambda_.5} parent=39 // pred_check_branch
        %358 = sbr.rel (%p356) target = $region44
      $region43: #{_lambda_.5} parent=39 // pred_region
        %s359 = smul.u32 32, %s15
        %p360 = scmp.lt.s32.totalorder %s359, 63
        %s361 = scalar_select %p360, %s359, 63
        %s362 = smul.addr %s361, 8
        %s363 = scalar_lea.vmem %s3, %s362
      $region44: #{_lambda_.5} parent=39 // pred_fallthru
        _
    $region40: #{_lambda_.5} parent=5 // pred_fallthru
      _
  $region6: #{_lambda_.5} parent=0 // loop_footer
    %s13 = sadd.s32 1, %s9
  $region7: #{_lambda_.5} parent=0 // loop_footer_branch
    %8 = sbr.rel target = $region3
  $region8: #{_lambda_.5} parent=0 // loop_exit
    _

// kernel: _lambda_.4
$region0: #{_lambda_.4}
  #allocation0 [shape = 'u32[]', space=smem, size = 0x4, offset = 0x4, fixed_abs, tag = 'smem constant byte address 0x4 - core index']
  #allocation1 [shape = 'u32[72,128]{1,0:T(1,128)}', space=vmem, size = 0x9000, scoped, tag = 'internal scratch']
  %s0 = inlined_call_operand.vmem [shape: f32[512,128], index: 0, kind: input, shape index: {}]
  %s1 = inlined_call_operand.vmem [shape: f32[128,128], index: 1, kind: input, shape index: {}]
  %s2 = inlined_call_operand.vmem [shape: f32[512,128], index: 2, kind: output, shape index: {0}]
  %s3 = inlined_call_operand.vmem [shape: f32[8,128], index: 3, kind: output, shape index: {1}]
  %s4 = inlined_call_operand.vmem [shape: f32[8,128], index: 4, kind: output, shape index: {2}]
  %5 = xla_tuple %s2, %s3, %s4
  %s6 = sld [smem:[#allocation0]]
  $region61: #{_lambda_.4} parent=0
    _
  %s8 = ssub.s32 1, %s6
  %s9 = scalar_select 0, %s8, %s6
  loop: start=0, step=1, limit=4
  $region2: #{_lambda_.4} parent=0 // loop_pre_header
    _
  $region3: #{_lambda_.4} parent=0 // loop_header
    %s11 = sphi 0, %s15
    %p12 = scmp.ge.s32.totalorder %s11, 4
    %s21 = sphi 0, %s23
    %s24 = sphi 0, %s21
    %s25 = sphi 0, %s24
    %s41 = sphi 0, %s25
    %s45 = sphi 0, %s45
    %s47 = sphi 0, %s45
    %s48 = sphi 0, %s47
    %s62 = sphi 0, %s48
    %s68 = sphi 0, %s70
    %s71 = sphi 0, %s68
    %s72 = sphi 0, %s71
    %s88 = sphi 0, %s72
    %s92 = sphi 0, %s92
    %s94 = sphi 0, %s92
    %s95 = sphi 0, %s94
    %s109 = sphi 0, %s95
    %s113 = sphi 0, %s113
    %s115 = sphi 0, %s113
    %s116 = sphi 0, %s115
    %s130 = sphi 0, %s116
  $region4: #{_lambda_.4} parent=0 // loop_header_branch
    %14 = sbr.rel (%p12) target = $region8
  $region5: #{_lambda_.4} parent=0 // loop_body
    %s16 = ssub.s32 %s11, 1
    %s17 = ssub.s32 %s11, 2
    %s18 = sadd.s32 %s11, 1
    %s19 = ssub.s32 %s11, %s18
    %p20 = scmp.eq.s32.totalorder %s19, 0
    %s22 = sadd.s32 %s21, 1
    %s23 = scalar_select %p20, %s21, %s22
    %p26 = pneg %p20
    %p27 = scmp.eq.s32.totalorder %s11, 1
    %p28 = por %p26, %p27
    %p29 = scmp.ne.s32.totalorder %s21, %s24
    %p30 = scmp.eq.s32.totalorder %s11, 0
    %p31 = por %p29, %p30
    %p32 = scmp.ne.s32.totalorder %s21, %s24
    %p33 = scmp.eq.s32.totalorder %s16, 1
    %p34 = por %p32, %p33
    %p35 = scmp.ne.s32.totalorder %s24, %s25
    %p36 = scmp.eq.s32.totalorder %s16, 0
    %p37 = por %p35, %p36
    %p38 = scmp.ne.s32.totalorder %s24, %s25
    %p39 = scmp.eq.s32.totalorder %s17, 1
    %p40 = por %p38, %p39
    %p42 = scmp.ne.s32.totalorder %s25, %s41
    %p43 = scmp.eq.s32.totalorder %s17, 0
    %p44 = por %p42, %p43
    %s46 = sadd.s32 %s45, 1
    %p49 = scmp.eq.s32.totalorder %s11, 1
    %p50 = scmp.ne.s32.totalorder %s45, %s47
    %p51 = scmp.eq.s32.totalorder %s11, 0
    %p52 = por %p50, %p51
    %p53 = scmp.ne.s32.totalorder %s45, %s47
    %p54 = scmp.eq.s32.totalorder %s16, 1
    %p55 = por %p53, %p54
    %p56 = scmp.ne.s32.totalorder %s47, %s48
    %p57 = scmp.eq.s32.totalorder %s16, 0
    %p58 = por %p56, %p57
    %p59 = scmp.ne.s32.totalorder %s47, %s48
    %p60 = scmp.eq.s32.totalorder %s17, 1
    %p61 = por %p59, %p60
    %p63 = scmp.ne.s32.totalorder %s48, %s62
    %p64 = scmp.eq.s32.totalorder %s17, 0
    %p65 = por %p63, %p64
    %s66 = ssub.s32 %s11, %s18
    %p67 = scmp.eq.s32.totalorder %s66, 0
    %s69 = sadd.s32 %s68, 1
    %s70 = scalar_select %p67, %s68, %s69
    %p73 = pneg %p67
    %p74 = scmp.eq.s32.totalorder %s11, 1
    %p75 = por %p73, %p74
    %p76 = scmp.ne.s32.totalorder %s68, %s71
    %p77 = scmp.eq.s32.totalorder %s11, 0
    %p78 = por %p76, %p77
    %p79 = scmp.ne.s32.totalorder %s68, %s71
    %p80 = scmp.eq.s32.totalorder %s16, 1
    %p81 = por %p79, %p80
    %p82 = scmp.ne.s32.totalorder %s71, %s72
    %p83 = scmp.eq.s32.totalorder %s16, 0
    %p84 = por %p82, %p83
    %p85 = scmp.ne.s32.totalorder %s71, %s72
    %p86 = scmp.eq.s32.totalorder %s17, 1
    %p87 = por %p85, %p86
    %p89 = scmp.ne.s32.totalorder %s72, %s88
    %p90 = scmp.eq.s32.totalorder %s17, 0
    %p91 = por %p89, %p90
    %s93 = sadd.s32 %s92, 1
    %p96 = scmp.eq.s32.totalorder %s11, 1
    %p97 = scmp.ne.s32.totalorder %s92, %s94
    %p98 = scmp.eq.s32.totalorder %s11, 0
    %p99 = por %p97, %p98
    %p100 = scmp.ne.s32.totalorder %s92, %s94
    %p101 = scmp.eq.s32.totalorder %s16, 1
    %p102 = por %p100, %p101
    %p103 = scmp.ne.s32.totalorder %s94, %s95
    %p104 = scmp.eq.s32.totalorder %s16, 0
    %p105 = por %p103, %p104
    %p106 = scmp.ne.s32.totalorder %s94, %s95
    %p107 = scmp.eq.s32.totalorder %s17, 1
    %p108 = por %p106, %p107
    %p110 = scmp.ne.s32.totalorder %s95, %s109
    %p111 = scmp.eq.s32.totalorder %s17, 0
    %p112 = por %p110, %p111
    %s114 = sadd.s32 %s113, 1
    %p117 = scmp.eq.s32.totalorder %s11, 1
    %p118 = scmp.ne.s32.totalorder %s113, %s115
    %p119 = scmp.eq.s32.totalorder %s11, 0
    %p120 = por %p118, %p119
    %p121 = scmp.ne.s32.totalorder %s113, %s115
    %p122 = scmp.eq.s32.totalorder %s16, 1
    %p123 = por %p121, %p122
    %p124 = scmp.ne.s32.totalorder %s115, %s116
    %p125 = scmp.eq.s32.totalorder %s16, 0
    %p126 = por %p124, %p125
    %p127 = scmp.ne.s32.totalorder %s115, %s116
    %p128 = scmp.eq.s32.totalorder %s17, 1
    %p129 = por %p127, %p128
    %p131 = scmp.ne.s32.totalorder %s116, %s130
    %p132 = scmp.eq.s32.totalorder %s17, 0
    %p133 = por %p131, %p132
    %p134 = scmp.le.s32.totalorder 1, %s11
    %p135 = scmp.lt.s32.totalorder %s11, 3
    %p136 = pnand %p134, %p135
    %p137 = pneg %p136
    // Predicated region
    $region9: #{_lambda_.4} parent=5 // pred_check
      _
    $region10: #{_lambda_.4} parent=5 // pred_check_branch
      %139 = sbr.rel (%p136) target = $region12
    $region11: #{_lambda_.4} parent=5 // pred_region
      %s140 = ssub.s32 %s11, 1
      // Predicated region
      $region13: #{_lambda_.4} parent=11 // pred_check
        %p141 = pneg %p58
      $region14: #{_lambda_.4} parent=11 // pred_check_branch
        %143 = sbr.rel (%p141) target = $region16
      $region15: #{_lambda_.4} parent=11 // pred_region
        _
      $region16: #{_lambda_.4} parent=11 // pred_fallthru
        _
    $region12: #{_lambda_.4} parent=5 // pred_fallthru
      _
    %p144 = scmp.lt.s32.totalorder %s11, 2
    // Predicated region
    $region17: #{_lambda_.4} parent=5 // pred_check
      %p145 = pneg %p144
    $region18: #{_lambda_.4} parent=5 // pred_check_branch
      %147 = sbr.rel (%p145) target = $region20
    $region19: #{_lambda_.4} parent=5 // pred_region
      // Predicated region
      $region21: #{_lambda_.4} parent=19 // pred_check
        %p148 = pneg %p31
      $region22: #{_lambda_.4} parent=19 // pred_check_branch
        %150 = sbr.rel (%p148) target = $region24
      $region23: #{_lambda_.4} parent=19 // pred_region
        %s151 = smul.u32 32, %s11
        %p152 = scmp.lt.s32.totalorder %s151, 63
        %s153 = scalar_select %p152, %s151, 63
        %s154 = smul.addr %s153, 8
        %s155 = scalar_lea.vmem %s0, %s154
        %s156 = smul.u32 32, %s11
      $region24: #{_lambda_.4} parent=19 // pred_fallthru
        _
    $region20: #{_lambda_.4} parent=5 // pred_fallthru
      _
    %p157 = scmp.le.s32.totalorder 1, %s11
    %p158 = scmp.lt.s32.totalorder %s11, 3
    %p159 = pnand %p157, %p158
    %p160 = pneg %p159
    // Predicated region
    $region25: #{_lambda_.4} parent=5 // pred_check
      _
    $region26: #{_lambda_.4} parent=5 // pred_check_branch
      %162 = sbr.rel (%p159) target = $region28
    $region27: #{_lambda_.4} parent=5 // pred_region
      %s163 = ssub.s32 %s11, 1
      %s164 = smul.u32 32, %s16
      %p165 = scmp.lt.s32.totalorder %s164, 63
      %s166 = scalar_select %p165, %s164, 63
      %s167 = smul.addr %s166, 8
      %s168 = scalar_lea.vmem %s0, %s167
      %p169 = pneg %p37
      %p170 = pneg %p34
      %p171 = pneg %p58
      %p172 = pneg %p55
      %p173 = pneg %p84
      %p174 = pneg %p81
      %s175 = smul.u32 32, %s16
      %p176 = scmp.lt.s32.totalorder %s175, 63
      %s177 = scalar_select %p176, %s175, 63
      %s178 = smul.addr %s177, 8
      %s179 = scalar_lea.vmem %s2, %s178
      %p180 = pneg %p105
      %p181 = pneg %p102
      %p182 = pneg %p126
      %p183 = pneg %p123
      %s184 = smul.u32 32, %s16
      %p185 = scmp.lt.s32.totalorder %s184, 63
      %s186 = scalar_select %p185, %s184, 63
      %s187 = smul.addr %s186, 8
      %s188 = scalar_lea.vmem %s0, %s187
      %s189 = smul.u32 32, %s16
      %s190 = smul.u32 32, %s16
      %p191 = scmp.lt.s32.totalorder %s190, 63
      %s192 = scalar_select %p191, %s190, 63
      %s193 = smul.addr %s192, 8
      %s194 = scalar_lea.vmem %s2, %s193
      %s195 = smul.u32 32, %s16
      %p196 = scmp.eq.s32.totalorder %s16, 0
      // Predicated region
      $region29: #{_lambda_.4} parent=27 // pred_check
        %p197 = pneg %p196
      $region30: #{_lambda_.4} parent=27 // pred_check_branch
        %199 = sbr.rel (%p197) target = $region32
      $region31: #{_lambda_.4} parent=27 // pred_region
        %200 = vst [vmem:[%s3] sm:$0xff] 0.0
        %201 = vst [vmem:[%s4] sm:$0xff] 0.0
      $region32: #{_lambda_.4} parent=27 // pred_fallthru
        _
      %v202 = vld [vmem:[%s188] sm:$0xff]
      %v203 = vld [vmem:[%s188 + $0x8] sm:$0xff]
      %v204 = vld [vmem:[%s188 + $0x10] sm:$0xff]
      %v205 = vld [vmem:[%s188 + $0x18] sm:$0xff]
      %v206 = vld [vmem:[%s188 + $0x20] sm:$0xff]
      %v207 = vld [vmem:[%s188 + $0x28] sm:$0xff]
      %v208 = vld [vmem:[%s188 + $0x30] sm:$0xff]
      %v209 = vld [vmem:[%s188 + $0x38] sm:$0xff]
      %v210 = vld [vmem:[%s188 + $0x40] sm:$0xff]
      %v211 = vld [vmem:[%s188 + $0x48] sm:$0xff]
      %v212 = vld [vmem:[%s188 + $0x50] sm:$0xff]
      %v213 = vld [vmem:[%s188 + $0x58] sm:$0xff]
      %v214 = vld [vmem:[%s188 + $0x60] sm:$0xff]
      %v215 = vld [vmem:[%s188 + $0x68] sm:$0xff]
      %v216 = vld [vmem:[%s188 + $0x70] sm:$0xff]
      %v217 = vld [vmem:[%s188 + $0x78] sm:$0xff]
      %v218 = vld [vmem:[%s188 + $0x80] sm:$0xff]
      %v219 = vld [vmem:[%s188 + $0x88] sm:$0xff]
      %v220 = vld [vmem:[%s188 + $0x90] sm:$0xff]
      %v221 = vld [vmem:[%s188 + $0x98] sm:$0xff]
      %v222 = vld [vmem:[%s188 + $0xa0] sm:$0xff]
      %v223 = vld [vmem:[%s188 + $0xa8] sm:$0xff]
      %v224 = vld [vmem:[%s188 + $0xb0] sm:$0xff]
      %v225 = vld [vmem:[%s188 + $0xb8] sm:$0xff]
      %v226 = vld [vmem:[%s188 + $0xc0] sm:$0xff]
      %v227 = vld [vmem:[%s188 + $0xc8] sm:$0xff]
      %v228 = vld [vmem:[%s188 + $0xd0] sm:$0xff]
      %v229 = vld [vmem:[%s188 + $0xd8] sm:$0xff]
      %v230 = vld [vmem:[%s188 + $0xe0] sm:$0xff]
      %v231 = vld [vmem:[%s188 + $0xe8] sm:$0xff]
      %v232 = vld [vmem:[%s188 + $0xf0] sm:$0xff]
      %v233 = vld [vmem:[%s188 + $0xf8] sm:$0xff]
      %v234 = vld [vmem:[%s1] sm:$0xff]
      %v235 = vld [vmem:[%s1 + $0x8] sm:$0xff]
      %v236 = vld [vmem:[%s1 + $0x10] sm:$0xff]
      %v237 = vld [vmem:[%s1 + $0x18] sm:$0xff]
      %v238 = vld [vmem:[%s1 + $0x20] sm:$0xff]
      %v239 = vld [vmem:[%s1 + $0x28] sm:$0xff]
      %v240 = vld [vmem:[%s1 + $0x30] sm:$0xff]
      %v241 = vld [vmem:[%s1 + $0x38] sm:$0xff]
      %v242 = vld [vmem:[%s1 + $0x40] sm:$0xff]
      %v243 = vld [vmem:[%s1 + $0x48] sm:$0xff]
      %v244 = vld [vmem:[%s1 + $0x50] sm:$0xff]
      %v245 = vld [vmem:[%s1 + $0x58] sm:$0xff]
      %v246 = vld [vmem:[%s1 + $0x60] sm:$0xff]
      %v247 = vld [vmem:[%s1 + $0x68] sm:$0xff]
      %v248 = vld [vmem:[%s1 + $0x70] sm:$0xff]
      %v249 = vld [vmem:[%s1 + $0x78] sm:$0xff]
      %250 = vmatpush.msra.mxu0 %v249
      %251 = vmatpush.msra.mxu0 %v248
      %252 = vmatpush.msra.mxu0 %v247
      %253 = vmatpush.msra.mxu0 %v246
      %254 = vmatpush.msra.mxu0 %v245
      %255 = vmatpush.msra.mxu0 %v244
      %256 = vmatpush.msra.mxu0 %v243
      %257 = vmatpush.msra.mxu0 %v242
      %258 = vmatpush.msra.mxu0 %v241
      %259 = vmatpush.msra.mxu0 %v240
      %260 = vmatpush.msra.mxu0 %v239
      %261 = vmatpush.msra.mxu0 %v238
      %262 = vmatpush.msra.mxu0 %v237
      %263 = vmatpush.msra.mxu0 %v236
      %264 = vmatpush.msra.mxu0 %v235
      %265 = vmatpush.msra.mxu0 %v234
      %266 = vmatmul.f32.gmra.mxu0 %v202
      %v267 = vpop.f32.mrf.mxu0
      %v268 = vadd.f32 0.0, %v267
      %269 = vmatmul.f32.gmra.mxu0 %v203
      %v270 = vpop.f32.mrf.mxu0
      %v271 = vadd.f32 0.0, %v270
      %272 = vmatmul.f32.gmra.mxu0 %v204
      %v273 = vpop.f32.mrf.mxu0
      %v274 = vadd.f32 0.0, %v273
      %275 = vmatmul.f32.gmra.mxu0 %v205
      %v276 = vpop.f32.mrf.mxu0
      %v277 = vadd.f32 0.0, %v276
      %278 = vmatmul.f32.gmra.mxu0 %v206
      %v279 = vpop.f32.mrf.mxu0
      %v280 = vadd.f32 0.0, %v279
      %281 = vmatmul.f32.gmra.mxu0 %v207
      %v282 = vpop.f32.mrf.mxu0
      %v283 = vadd.f32 0.0, %v282
      %284 = vmatmul.f32.gmra.mxu0 %v208
      %v285 = vpop.f32.mrf.mxu0
      %v286 = vadd.f32 0.0, %v285
      %287 = vmatmul.f32.gmra.mxu0 %v209
      %v288 = vpop.f32.mrf.mxu0
      %v289 = vadd.f32 0.0, %v288
      %290 = vmatmul.f32.gmra.mxu0 %v210
      %v291 = vpop.f32.mrf.mxu0
      %v292 = vadd.f32 0.0, %v291
      %293 = vmatmul.f32.gmra.mxu0 %v211
      %v294 = vpop.f32.mrf.mxu0
      %v295 = vadd.f32 0.0, %v294
      %296 = vmatmul.f32.gmra.mxu0 %v212
      %v297 = vpop.f32.mrf.mxu0
      %v298 = vadd.f32 0.0, %v297
      %299 = vmatmul.f32.gmra.mxu0 %v213
      %v300 = vpop.f32.mrf.mxu0
      %v301 = vadd.f32 0.0, %v300
      %302 = vmatmul.f32.gmra.mxu0 %v214
      %v303 = vpop.f32.mrf.mxu0
      %v304 = vadd.f32 0.0, %v303
      %305 = vmatmul.f32.gmra.mxu0 %v215
      %v306 = vpop.f32.mrf.mxu0
      %v307 = vadd.f32 0.0, %v306
      %308 = vmatmul.f32.gmra.mxu0 %v216
      %v309 = vpop.f32.mrf.mxu0
      %v310 = vadd.f32 0.0, %v309
      %311 = vmatmul.f32.gmra.mxu0 %v217
      %v312 = vpop.f32.mrf.mxu0
      %v313 = vadd.f32 0.0, %v312
      %314 = vmatmul.f32.gmra.mxu0 %v218
      %v315 = vpop.f32.mrf.mxu0
      %v316 = vadd.f32 0.0, %v315
      %317 = vmatmul.f32.gmra.mxu0 %v219
      %v318 = vpop.f32.mrf.mxu0
      %v319 = vadd.f32 0.0, %v318
      %320 = vmatmul.f32.gmra.mxu0 %v220
      %v321 = vpop.f32.mrf.mxu0
      %v322 = vadd.f32 0.0, %v321
      %323 = vmatmul.f32.gmra.mxu0 %v221
      %v324 = vpop.f32.mrf.mxu0
      %v325 = vadd.f32 0.0, %v324
      %326 = vmatmul.f32.gmra.mxu0 %v222
      %v327 = vpop.f32.mrf.mxu0
      %v328 = vadd.f32 0.0, %v327
      %329 = vmatmul.f32.gmra.mxu0 %v223
      %v330 = vpop.f32.mrf.mxu0
      %v331 = vadd.f32 0.0, %v330
      %332 = vmatmul.f32.gmra.mxu0 %v224
      %v333 = vpop.f32.mrf.mxu0
      %v334 = vadd.f32 0.0, %v333
      %335 = vmatmul.f32.gmra.mxu0 %v225
      %v336 = vpop.f32.mrf.mxu0
      %v337 = vadd.f32 0.0, %v336
      %338 = vmatmul.f32.gmra.mxu0 %v226
      %v339 = vpop.f32.mrf.mxu0
      %v340 = vadd.f32 0.0, %v339
      %341 = vmatmul.f32.gmra.mxu0 %v227
      %v342 = vpop.f32.mrf.mxu0
      %v343 = vadd.f32 0.0, %v342
      %344 = vmatmul.f32.gmra.mxu0 %v228
      %v345 = vpop.f32.mrf.mxu0
      %v346 = vadd.f32 0.0, %v345
      %347 = vmatmul.f32.gmra.mxu0 %v229
      %v348 = vpop.f32.mrf.mxu0
      %v349 = vadd.f32 0.0, %v348
      %350 = vmatmul.f32.gmra.mxu0 %v230
      %v351 = vpop.f32.mrf.mxu0
      %v352 = vadd.f32 0.0, %v351
      %353 = vmatmul.f32.gmra.mxu0 %v231
      %v354 = vpop.f32.mrf.mxu0
      %v355 = vadd.f32 0.0, %v354
      %356 = vmatmul.f32.gmra.mxu0 %v232
      %v357 = vpop.f32.mrf.mxu0
      %v358 = vadd.f32 0.0, %v357
      %359 = vmatmul.f32.gmra.mxu0 %v233
      %v360 = vpop.f32.mrf.mxu0
      %v361 = vadd.f32 0.0, %v360
      %362 = vdwg.mxu0
      %363 = vst [vmem:[%s194] sm:$0xff] %v268
      %364 = vst [vmem:[%s194 + $0x8] sm:$0xff] %v271
      %365 = vst [vmem:[%s194 + $0x10] sm:$0xff] %v274
      %366 = vst [vmem:[%s194 + $0x18] sm:$0xff] %v277
      %367 = vst [vmem:[%s194 + $0x20] sm:$0xff] %v280
      %368 = vst [vmem:[%s194 + $0x28] sm:$0xff] %v283
      %369 = vst [vmem:[%s194 + $0x30] sm:$0xff] %v286
      %370 = vst [vmem:[%s194 + $0x38] sm:$0xff] %v289
      %371 = vst [vmem:[%s194 + $0x40] sm:$0xff] %v292
      %372 = vst [vmem:[%s194 + $0x48] sm:$0xff] %v295
      %373 = vst [vmem:[%s194 + $0x50] sm:$0xff] %v298
      %374 = vst [vmem:[%s194 + $0x58] sm:$0xff] %v301
      %375 = vst [vmem:[%s194 + $0x60] sm:$0xff] %v304
      %376 = vst [vmem:[%s194 + $0x68] sm:$0xff] %v307
      %377 = vst [vmem:[%s194 + $0x70] sm:$0xff] %v310
      %378 = vst [vmem:[%s194 + $0x78] sm:$0xff] %v313
      %379 = vst [vmem:[%s194 + $0x80] sm:$0xff] %v316
      %380 = vst [vmem:[%s194 + $0x88] sm:$0xff] %v319
      %381 = vst [vmem:[%s194 + $0x90] sm:$0xff] %v322
      %382 = vst [vmem:[%s194 + $0x98] sm:$0xff] %v325
      %383 = vst [vmem:[%s194 + $0xa0] sm:$0xff] %v328
      %384 = vst [vmem:[%s194 + $0xa8] sm:$0xff] %v331
      %385 = vst [vmem:[%s194 + $0xb0] sm:$0xff] %v334
      %386 = vst [vmem:[%s194 + $0xb8] sm:$0xff] %v337
      %387 = vst [vmem:[%s194 + $0xc0] sm:$0xff] %v340
      %388 = vst [vmem:[%s194 + $0xc8] sm:$0xff] %v343
      %389 = vst [vmem:[%s194 + $0xd0] sm:$0xff] %v346
      %390 = vst [vmem:[%s194 + $0xd8] sm:$0xff] %v349
      %391 = vst [vmem:[%s194 + $0xe0] sm:$0xff] %v352
      %392 = vst [vmem:[%s194 + $0xe8] sm:$0xff] %v355
      %393 = vst [vmem:[%s194 + $0xf0] sm:$0xff] %v358
      %394 = vst [vmem:[%s194 + $0xf8] sm:$0xff] %v361
      %v395 = vld [vmem:[%s3] sm:$0xff]
      %v396 = vadd.f32 %v268, %v271
      %v397 = vadd.f32 %v396, %v274
      %v398 = vadd.f32 %v397, %v277
      %v399 = vadd.f32 %v398, %v280
      %v400 = vadd.f32 %v399, %v283
      %v401 = vadd.f32 %v400, %v286
      %v402 = vadd.f32 %v401, %v289
      %v403 = vadd.f32 %v402, %v292
      %v404 = vadd.f32 %v403, %v295
      %v405 = vadd.f32 %v404, %v298
      %v406 = vadd.f32 %v405, %v301
      %v407 = vadd.f32 %v406, %v304
      %v408 = vadd.f32 %v407, %v307
      %v409 = vadd.f32 %v408, %v310
      %v410 = vadd.f32 %v409, %v313
      %v411 = vadd.f32 %v410, %v316
      %v412 = vadd.f32 %v411, %v319
      %v413 = vadd.f32 %v412, %v322
      %v414 = vadd.f32 %v413, %v325
      %v415 = vadd.f32 %v414, %v328
      %v416 = vadd.f32 %v415, %v331
      %v417 = vadd.f32 %v416, %v334
      %v418 = vadd.f32 %v417, %v337
      %v419 = vadd.f32 %v418, %v340
      %v420 = vadd.f32 %v419, %v343
      %v421 = vadd.f32 %v420, %v346
      %v422 = vadd.f32 %v421, %v349
      %v423 = vadd.f32 %v422, %v352
      %v424 = vadd.f32 %v423, %v355
      %v425 = vadd.f32 %v424, %v358
      %v426 = vadd.f32 %v425, %v361
      %v427 = vadd.f32 %v395, %v426
      %428 = vst [vmem:[%s3] sm:$0xff] %v427
      %v429 = vld [vmem:[%s4] sm:$0xff]
      %v430 = vmul.f32 %v268, %v268
      %v431 = vmul.f32 %v271, %v271
      %v432 = vmul.f32 %v274, %v274
      %v433 = vmul.f32 %v277, %v277
      %v434 = vmul.f32 %v280, %v280
      %v435 = vmul.f32 %v283, %v283
      %v436 = vmul.f32 %v286, %v286
      %v437 = vmul.f32 %v289, %v289
      %v438 = vmul.f32 %v292, %v292
      %v439 = vmul.f32 %v295, %v295
      %v440 = vmul.f32 %v298, %v298
      %v441 = vmul.f32 %v301, %v301
      %v442 = vmul.f32 %v304, %v304
      %v443 = vmul.f32 %v307, %v307
      %v444 = vmul.f32 %v310, %v310
      %v445 = vmul.f32 %v313, %v313
      %v446 = vmul.f32 %v316, %v316
      %v447 = vmul.f32 %v319, %v319
      %v448 = vmul.f32 %v322, %v322
      %v449 = vmul.f32 %v325, %v325
      %v450 = vmul.f32 %v328, %v328
      %v451 = vmul.f32 %v331, %v331
      %v452 = vmul.f32 %v334, %v334
      %v453 = vmul.f32 %v337, %v337
      %v454 = vmul.f32 %v340, %v340
      %v455 = vmul.f32 %v343, %v343
      %v456 = vmul.f32 %v346, %v346
      %v457 = vmul.f32 %v349, %v349
      %v458 = vmul.f32 %v352, %v352
      %v459 = vmul.f32 %v355, %v355
      %v460 = vmul.f32 %v358, %v358
      %v461 = vmul.f32 %v361, %v361
      %v462 = vadd.f32 %v430, %v431
      %v463 = vadd.f32 %v462, %v432
      %v464 = vadd.f32 %v463, %v433
      %v465 = vadd.f32 %v464, %v434
      %v466 = vadd.f32 %v465, %v435
      %v467 = vadd.f32 %v466, %v436
      %v468 = vadd.f32 %v467, %v437
      %v469 = vadd.f32 %v468, %v438
      %v470 = vadd.f32 %v469, %v439
      %v471 = vadd.f32 %v470, %v440
      %v472 = vadd.f32 %v471, %v441
      %v473 = vadd.f32 %v472, %v442
      %v474 = vadd.f32 %v473, %v443
      %v475 = vadd.f32 %v474, %v444
      %v476 = vadd.f32 %v475, %v445
      %v477 = vadd.f32 %v476, %v446
      %v478 = vadd.f32 %v477, %v447
      %v479 = vadd.f32 %v478, %v448
      %v480 = vadd.f32 %v479, %v449
      %v481 = vadd.f32 %v480, %v450
      %v482 = vadd.f32 %v481, %v451
      %v483 = vadd.f32 %v482, %v452
      %v484 = vadd.f32 %v483, %v453
      %v485 = vadd.f32 %v484, %v454
      %v486 = vadd.f32 %v485, %v455
      %v487 = vadd.f32 %v486, %v456
      %v488 = vadd.f32 %v487, %v457
      %v489 = vadd.f32 %v488, %v458
      %v490 = vadd.f32 %v489, %v459
      %v491 = vadd.f32 %v490, %v460
      %v492 = vadd.f32 %v491, %v461
      %v493 = vadd.f32 %v429, %v492
      %494 = vst [vmem:[%s4] sm:$0xff] %v493
      %s495 = smul.u32 32, %s16
      %p496 = scmp.lt.s32.totalorder %s495, 63
      %s497 = scalar_select %p496, %s495, 63
      %s498 = smul.addr %s497, 8
      %s499 = scalar_lea.vmem %s2, %s498
      // Predicated region
      $region33: #{_lambda_.4} parent=27 // pred_check
        %p500 = pneg %p81
      $region34: #{_lambda_.4} parent=27 // pred_check_branch
        %502 = sbr.rel (%p500) target = $region36
      $region35: #{_lambda_.4} parent=27 // pred_region
        %s503 = smul.u32 32, %s16
      $region36: #{_lambda_.4} parent=27 // pred_fallthru
        _
      // Predicated region
      $region37: #{_lambda_.4} parent=27 // pred_check
        %p504 = pneg %p102
      $region38: #{_lambda_.4} parent=27 // pred_check_branch
        %506 = sbr.rel (%p504) target = $region40
      $region39: #{_lambda_.4} parent=27 // pred_region
        _
      $region40: #{_lambda_.4} parent=27 // pred_fallthru
        _
      // Predicated region
      $region41: #{_lambda_.4} parent=27 // pred_check
        %p507 = pneg %p123
      $region42: #{_lambda_.4} parent=27 // pred_check_branch
        %509 = sbr.rel (%p507) target = $region44
      $region43: #{_lambda_.4} parent=27 // pred_region
        _
      $region44: #{_lambda_.4} parent=27 // pred_fallthru
        _
      // Predicated region
      $region45: #{_lambda_.4} parent=27 // pred_check
        %p510 = pneg %p102
      $region46: #{_lambda_.4} parent=27 // pred_check_branch
        %512 = sbr.rel (%p510) target = $region48
      $region47: #{_lambda_.4} parent=27 // pred_region
        _
      $region48: #{_lambda_.4} parent=27 // pred_fallthru
        _
      // Predicated region
      $region49: #{_lambda_.4} parent=27 // pred_check
        %p513 = pneg %p123
      $region50: #{_lambda_.4} parent=27 // pred_check_branch
        %515 = sbr.rel (%p513) target = $region52
      $region51: #{_lambda_.4} parent=27 // pred_region
        _
      $region52: #{_lambda_.4} parent=27 // pred_fallthru
        _
    $region28: #{_lambda_.4} parent=5 // pred_fallthru
      _
    %p516 = scmp.le.s32.totalorder 2, %s11
    // Predicated region
    $region53: #{_lambda_.4} parent=5 // pred_check
      %p517 = pneg %p516
    $region54: #{_lambda_.4} parent=5 // pred_check_branch
      %519 = sbr.rel (%p517) target = $region56
    $region55: #{_lambda_.4} parent=5 // pred_region
      %s520 = ssub.s32 %s11, 2
      // Predicated region
      $region57: #{_lambda_.4} parent=55 // pred_check
        %p521 = pneg %p87
      $region58: #{_lambda_.4} parent=55 // pred_check_branch
        %523 = sbr.rel (%p521) target = $region60
      $region59: #{_lambda_.4} parent=55 // pred_region
        %s524 = smul.u32 32, %s17
        %p525 = scmp.lt.s32.totalorder %s524, 63
        %s526 = scalar_select %p525, %s524, 63
        %s527 = smul.addr %s526, 8
        %s528 = scalar_lea.vmem %s2, %s527
      $region60: #{_lambda_.4} parent=55 // pred_fallthru
        _
    $region56: #{_lambda_.4} parent=5 // pred_fallthru
      _
  $region6: #{_lambda_.4} parent=0 // loop_footer
    %s15 = sadd.s32 1, %s11
  $region7: #{_lambda_.4} parent=0 // loop_footer_branch
    %10 = sbr.rel target = $region3
  $region8: #{_lambda_.4} parent=0 // loop_exit
    _

// kernel: _lambda_.7
$region0: #{_lambda_.7}
  #allocation0 [shape = 'u32[]', space=smem, size = 0x4, offset = 0x4, fixed_abs, tag = 'smem constant byte address 0x4 - core index']
  #allocation1 [shape = 'u32[72,128]{1,0:T(1,128)}', space=vmem, size = 0x9000, scoped, tag = 'internal scratch']
  %s0 = inlined_call_operand.vmem [shape: f32[512,128], index: 0, kind: input, shape index: {}]
  %s1 = inlined_call_operand.vmem [shape: f32[1,128], index: 1, kind: input, shape index: {}]
  %s2 = inlined_call_operand.vmem [shape: f32[1,128], index: 2, kind: input, shape index: {}]
  %s3 = inlined_call_operand.vmem [shape: f32[512,128], index: 3, kind: input, shape index: {}]
  %s4 = inlined_call_operand.vmem [shape: f32[512,128], index: 4, kind: output, shape index: {}]
  %s5 = sld [smem:[#allocation0]]
  $region49: #{_lambda_.7} parent=0
    _
  %s7 = ssub.s32 1, %s5
  %s8 = scalar_select 0, %s7, %s5
  loop: start=0, step=1, limit=4
  $region2: #{_lambda_.7} parent=0 // loop_pre_header
    _
  $region3: #{_lambda_.7} parent=0 // loop_header
    %s10 = sphi 0, %s14
    %p11 = scmp.ge.s32.totalorder %s10, 4
    %s20 = sphi 0, %s22
    %s23 = sphi 0, %s20
    %s24 = sphi 0, %s23
    %s40 = sphi 0, %s24
    %s44 = sphi 0, %s44
    %s46 = sphi 0, %s44
    %s47 = sphi 0, %s46
    %s61 = sphi 0, %s47
    %s65 = sphi 0, %s65
    %s67 = sphi 0, %s65
    %s68 = sphi 0, %s67
    %s82 = sphi 0, %s68
    %s88 = sphi 0, %s90
    %s91 = sphi 0, %s88
    %s92 = sphi 0, %s91
    %s108 = sphi 0, %s92
    %s114 = sphi 0, %s116
    %s117 = sphi 0, %s114
    %s118 = sphi 0, %s117
    %s134 = sphi 0, %s118
  $region4: #{_lambda_.7} parent=0 // loop_header_branch
    %13 = sbr.rel (%p11) target = $region8
  $region5: #{_lambda_.7} parent=0 // loop_body
    %s15 = ssub.s32 %s10, 1
    %s16 = ssub.s32 %s10, 2
    %s17 = sadd.s32 %s10, 1
    %s18 = ssub.s32 %s10, %s17
    %p19 = scmp.eq.s32.totalorder %s18, 0
    %s21 = sadd.s32 %s20, 1
    %s22 = scalar_select %p19, %s20, %s21
    %p25 = pneg %p19
    %p26 = scmp.eq.s32.totalorder %s10, 1
    %p27 = por %p25, %p26
    %p28 = scmp.ne.s32.totalorder %s20, %s23
    %p29 = scmp.eq.s32.totalorder %s10, 0
    %p30 = por %p28, %p29
    %p31 = scmp.ne.s32.totalorder %s20, %s23
    %p32 = scmp.eq.s32.totalorder %s15, 1
    %p33 = por %p31, %p32
    %p34 = scmp.ne.s32.totalorder %s23, %s24
    %p35 = scmp.eq.s32.totalorder %s15, 0
    %p36 = por %p34, %p35
    %p37 = scmp.ne.s32.totalorder %s23, %s24
    %p38 = scmp.eq.s32.totalorder %s16, 1
    %p39 = por %p37, %p38
    %p41 = scmp.ne.s32.totalorder %s24, %s40
    %p42 = scmp.eq.s32.totalorder %s16, 0
    %p43 = por %p41, %p42
    %s45 = sadd.s32 %s44, 1
    %p48 = scmp.eq.s32.totalorder %s10, 1
    %p49 = scmp.ne.s32.totalorder %s44, %s46
    %p50 = scmp.eq.s32.totalorder %s10, 0
    %p51 = por %p49, %p50
    %p52 = scmp.ne.s32.totalorder %s44, %s46
    %p53 = scmp.eq.s32.totalorder %s15, 1
    %p54 = por %p52, %p53
    %p55 = scmp.ne.s32.totalorder %s46, %s47
    %p56 = scmp.eq.s32.totalorder %s15, 0
    %p57 = por %p55, %p56
    %p58 = scmp.ne.s32.totalorder %s46, %s47
    %p59 = scmp.eq.s32.totalorder %s16, 1
    %p60 = por %p58, %p59
    %p62 = scmp.ne.s32.totalorder %s47, %s61
    %p63 = scmp.eq.s32.totalorder %s16, 0
    %p64 = por %p62, %p63
    %s66 = sadd.s32 %s65, 1
    %p69 = scmp.eq.s32.totalorder %s10, 1
    %p70 = scmp.ne.s32.totalorder %s65, %s67
    %p71 = scmp.eq.s32.totalorder %s10, 0
    %p72 = por %p70, %p71
    %p73 = scmp.ne.s32.totalorder %s65, %s67
    %p74 = scmp.eq.s32.totalorder %s15, 1
    %p75 = por %p73, %p74
    %p76 = scmp.ne.s32.totalorder %s67, %s68
    %p77 = scmp.eq.s32.totalorder %s15, 0
    %p78 = por %p76, %p77
    %p79 = scmp.ne.s32.totalorder %s67, %s68
    %p80 = scmp.eq.s32.totalorder %s16, 1
    %p81 = por %p79, %p80
    %p83 = scmp.ne.s32.totalorder %s68, %s82
    %p84 = scmp.eq.s32.totalorder %s16, 0
    %p85 = por %p83, %p84
    %s86 = ssub.s32 %s10, %s17
    %p87 = scmp.eq.s32.totalorder %s86, 0
    %s89 = sadd.s32 %s88, 1
    %s90 = scalar_select %p87, %s88, %s89
    %p93 = pneg %p87
    %p94 = scmp.eq.s32.totalorder %s10, 1
    %p95 = por %p93, %p94
    %p96 = scmp.ne.s32.totalorder %s88, %s91
    %p97 = scmp.eq.s32.totalorder %s10, 0
    %p98 = por %p96, %p97
    %p99 = scmp.ne.s32.totalorder %s88, %s91
    %p100 = scmp.eq.s32.totalorder %s15, 1
    %p101 = por %p99, %p100
    %p102 = scmp.ne.s32.totalorder %s91, %s92
    %p103 = scmp.eq.s32.totalorder %s15, 0
    %p104 = por %p102, %p103
    %p105 = scmp.ne.s32.totalorder %s91, %s92
    %p106 = scmp.eq.s32.totalorder %s16, 1
    %p107 = por %p105, %p106
    %p109 = scmp.ne.s32.totalorder %s92, %s108
    %p110 = scmp.eq.s32.totalorder %s16, 0
    %p111 = por %p109, %p110
    %s112 = ssub.s32 %s10, %s17
    %p113 = scmp.eq.s32.totalorder %s112, 0
    %s115 = sadd.s32 %s114, 1
    %s116 = scalar_select %p113, %s114, %s115
    %p119 = pneg %p113
    %p120 = scmp.eq.s32.totalorder %s10, 1
    %p121 = por %p119, %p120
    %p122 = scmp.ne.s32.totalorder %s114, %s117
    %p123 = scmp.eq.s32.totalorder %s10, 0
    %p124 = por %p122, %p123
    %p125 = scmp.ne.s32.totalorder %s114, %s117
    %p126 = scmp.eq.s32.totalorder %s15, 1
    %p127 = por %p125, %p126
    %p128 = scmp.ne.s32.totalorder %s117, %s118
    %p129 = scmp.eq.s32.totalorder %s15, 0
    %p130 = por %p128, %p129
    %p131 = scmp.ne.s32.totalorder %s117, %s118
    %p132 = scmp.eq.s32.totalorder %s16, 1
    %p133 = por %p131, %p132
    %p135 = scmp.ne.s32.totalorder %s118, %s134
    %p136 = scmp.eq.s32.totalorder %s16, 0
    %p137 = por %p135, %p136
    %p138 = scmp.le.s32.totalorder 1, %s10
    %p139 = scmp.lt.s32.totalorder %s10, 3
    %p140 = pnand %p138, %p139
    %p141 = pneg %p140
    // Predicated region
    $region9: #{_lambda_.7} parent=5 // pred_check
      _
    $region10: #{_lambda_.7} parent=5 // pred_check_branch
      %143 = sbr.rel (%p140) target = $region12
    $region11: #{_lambda_.7} parent=5 // pred_region
      %s144 = ssub.s32 %s10, 1
      // Predicated region
      $region13: #{_lambda_.7} parent=11 // pred_check
        %p145 = pneg %p57
      $region14: #{_lambda_.7} parent=11 // pred_check_branch
        %147 = sbr.rel (%p145) target = $region16
      $region15: #{_lambda_.7} parent=11 // pred_region
        _
      $region16: #{_lambda_.7} parent=11 // pred_fallthru
        _
      // Predicated region
      $region17: #{_lambda_.7} parent=11 // pred_check
        %p148 = pneg %p78
      $region18: #{_lambda_.7} parent=11 // pred_check_branch
        %150 = sbr.rel (%p148) target = $region20
      $region19: #{_lambda_.7} parent=11 // pred_region
        _
      $region20: #{_lambda_.7} parent=11 // pred_fallthru
        _
    $region12: #{_lambda_.7} parent=5 // pred_fallthru
      _
    %p151 = scmp.lt.s32.totalorder %s10, 2
    // Predicated region
    $region21: #{_lambda_.7} parent=5 // pred_check
      %p152 = pneg %p151
    $region22: #{_lambda_.7} parent=5 // pred_check_branch
      %154 = sbr.rel (%p152) target = $region24
    $region23: #{_lambda_.7} parent=5 // pred_region
      // Predicated region
      $region25: #{_lambda_.7} parent=23 // pred_check
        %p155 = pneg %p30
      $region26: #{_lambda_.7} parent=23 // pred_check_branch
        %157 = sbr.rel (%p155) target = $region28
      $region27: #{_lambda_.7} parent=23 // pred_region
        %s158 = smul.u32 32, %s10
        %p159 = scmp.lt.s32.totalorder %s158, 63
        %s160 = scalar_select %p159, %s158, 63
        %s161 = smul.addr %s160, 8
        %s162 = scalar_lea.vmem %s0, %s161
        %s163 = smul.u32 32, %s10
      $region28: #{_lambda_.7} parent=23 // pred_fallthru
        _
      // Predicated region
      $region29: #{_lambda_.7} parent=23 // pred_check
        %p164 = pneg %p98
      $region30: #{_lambda_.7} parent=23 // pred_check_branch
        %166 = sbr.rel (%p164) target = $region32
      $region31: #{_lambda_.7} parent=23 // pred_region
        %s167 = smul.u32 32, %s10
        %p168 = scmp.lt.s32.totalorder %s167, 63
        %s169 = scalar_select %p168, %s167, 63
        %s170 = smul.addr %s169, 8
        %s171 = scalar_lea.vmem %s3, %s170
        %s172 = smul.u32 32, %s10
      $region32: #{_lambda_.7} parent=23 // pred_fallthru
        _
    $region24: #{_lambda_.7} parent=5 // pred_fallthru
      _
    %p173 = scmp.le.s32.totalorder 1, %s10
    %p174 = scmp.lt.s32.totalorder %s10, 3
    %p175 = pnand %p173, %p174
    %p176 = pneg %p175
    // Predicated region
    $region33: #{_lambda_.7} parent=5 // pred_check
      _
    $region34: #{_lambda_.7} parent=5 // pred_check_branch
      %178 = sbr.rel (%p175) target = $region36
    $region35: #{_lambda_.7} parent=5 // pred_region
      %s179 = ssub.s32 %s10, 1
      %s180 = smul.u32 32, %s15
      %p181 = scmp.lt.s32.totalorder %s180, 63
      %s182 = scalar_select %p181, %s180, 63
      %s183 = smul.addr %s182, 8
      %s184 = scalar_lea.vmem %s0, %s183
      %p185 = pneg %p36
      %p186 = pneg %p33
      %p187 = pneg %p57
      %p188 = pneg %p54
      %p189 = pneg %p78
      %p190 = pneg %p75
      %s191 = smul.u32 32, %s15
      %p192 = scmp.lt.s32.totalorder %s191, 63
      %s193 = scalar_select %p192, %s191, 63
      %s194 = smul.addr %s193, 8
      %s195 = scalar_lea.vmem %s3, %s194
      %p196 = pneg %p104
      %p197 = pneg %p101
      %p198 = pneg %p130
      %p199 = pneg %p127
      %s200 = smul.u32 32, %s15
      %p201 = scmp.lt.s32.totalorder %s200, 63
      %s202 = scalar_select %p201, %s200, 63
      %s203 = smul.addr %s202, 8
      %s204 = scalar_lea.vmem %s4, %s203
      %s205 = smul.u32 32, %s15
      %p206 = scmp.lt.s32.totalorder %s205, 63
      %s207 = scalar_select %p206, %s205, 63
      %s208 = smul.addr %s207, 8
      %s209 = scalar_lea.vmem %s0, %s208
      %s210 = smul.u32 32, %s15
      %s211 = smul.u32 32, %s15
      %p212 = scmp.lt.s32.totalorder %s211, 63
      %s213 = scalar_select %p212, %s211, 63
      %s214 = smul.addr %s213, 8
      %s215 = scalar_lea.vmem %s3, %s214
      %s216 = smul.u32 32, %s15
      %s217 = smul.u32 32, %s15
      %p218 = scmp.lt.s32.totalorder %s217, 63
      %s219 = scalar_select %p218, %s217, 63
      %s220 = smul.addr %s219, 8
      %s221 = scalar_lea.vmem %s4, %s220
      %s222 = smul.u32 32, %s15
      %v223 = vld [vmem:[%s209] sm:$0xff]
      %v224 = vld [vmem:[%s209 + $0x8] sm:$0xff]
      %v225 = vld [vmem:[%s209 + $0x10] sm:$0xff]
      %v226 = vld [vmem:[%s209 + $0x18] sm:$0xff]
      %v227 = vld [vmem:[%s209 + $0x20] sm:$0xff]
      %v228 = vld [vmem:[%s209 + $0x28] sm:$0xff]
      %v229 = vld [vmem:[%s209 + $0x30] sm:$0xff]
      %v230 = vld [vmem:[%s209 + $0x38] sm:$0xff]
      %v231 = vld [vmem:[%s209 + $0x40] sm:$0xff]
      %v232 = vld [vmem:[%s209 + $0x48] sm:$0xff]
      %v233 = vld [vmem:[%s209 + $0x50] sm:$0xff]
      %v234 = vld [vmem:[%s209 + $0x58] sm:$0xff]
      %v235 = vld [vmem:[%s209 + $0x60] sm:$0xff]
      %v236 = vld [vmem:[%s209 + $0x68] sm:$0xff]
      %v237 = vld [vmem:[%s209 + $0x70] sm:$0xff]
      %v238 = vld [vmem:[%s209 + $0x78] sm:$0xff]
      %v239 = vld [vmem:[%s209 + $0x80] sm:$0xff]
      %v240 = vld [vmem:[%s209 + $0x88] sm:$0xff]
      %v241 = vld [vmem:[%s209 + $0x90] sm:$0xff]
      %v242 = vld [vmem:[%s209 + $0x98] sm:$0xff]
      %v243 = vld [vmem:[%s209 + $0xa0] sm:$0xff]
      %v244 = vld [vmem:[%s209 + $0xa8] sm:$0xff]
      %v245 = vld [vmem:[%s209 + $0xb0] sm:$0xff]
      %v246 = vld [vmem:[%s209 + $0xb8] sm:$0xff]
      %v247 = vld [vmem:[%s209 + $0xc0] sm:$0xff]
      %v248 = vld [vmem:[%s209 + $0xc8] sm:$0xff]
      %v249 = vld [vmem:[%s209 + $0xd0] sm:$0xff]
      %v250 = vld [vmem:[%s209 + $0xd8] sm:$0xff]
      %v251 = vld [vmem:[%s209 + $0xe0] sm:$0xff]
      %v252 = vld [vmem:[%s209 + $0xe8] sm:$0xff]
      %v253 = vld [vmem:[%s209 + $0xf0] sm:$0xff]
      %v254 = vld [vmem:[%s209 + $0xf8] sm:$0xff]
      %v255 = vld [vmem:[%s1] sm:$0x1]
      %v257 = vperm.slane %v255, 0
      %v259 = vmul.f32 %v223, %v257
      %v260 = vmul.f32 %v224, %v257
      %v261 = vmul.f32 %v225, %v257
      %v262 = vmul.f32 %v226, %v257
      %v263 = vmul.f32 %v227, %v257
      %v264 = vmul.f32 %v228, %v257
      %v265 = vmul.f32 %v229, %v257
      %v266 = vmul.f32 %v230, %v257
      %v267 = vmul.f32 %v231, %v257
      %v268 = vmul.f32 %v232, %v257
      %v269 = vmul.f32 %v233, %v257
      %v270 = vmul.f32 %v234, %v257
      %v271 = vmul.f32 %v235, %v257
      %v272 = vmul.f32 %v236, %v257
      %v273 = vmul.f32 %v237, %v257
      %v274 = vmul.f32 %v238, %v257
      %v275 = vmul.f32 %v239, %v257
      %v276 = vmul.f32 %v240, %v257
      %v277 = vmul.f32 %v241, %v257
      %v278 = vmul.f32 %v242, %v257
      %v279 = vmul.f32 %v243, %v257
      %v280 = vmul.f32 %v244, %v257
      %v281 = vmul.f32 %v245, %v257
      %v282 = vmul.f32 %v246, %v257
      %v283 = vmul.f32 %v247, %v257
      %v284 = vmul.f32 %v248, %v257
      %v285 = vmul.f32 %v249, %v257
      %v286 = vmul.f32 %v250, %v257
      %v287 = vmul.f32 %v251, %v257
      %v288 = vmul.f32 %v252, %v257
      %v289 = vmul.f32 %v253, %v257
      %v290 = vmul.f32 %v254, %v257
      %v291 = vld [vmem:[%s2] sm:$0x1]
      %v293 = vperm.slane %v291, 0
      %v295 = vadd.f32 %v259, %v293
      %v296 = vadd.f32 %v260, %v293
      %v297 = vadd.f32 %v261, %v293
      %v298 = vadd.f32 %v262, %v293
      %v299 = vadd.f32 %v263, %v293
      %v300 = vadd.f32 %v264, %v293
      %v301 = vadd.f32 %v265, %v293
      %v302 = vadd.f32 %v266, %v293
      %v303 = vadd.f32 %v267, %v293
      %v304 = vadd.f32 %v268, %v293
      %v305 = vadd.f32 %v269, %v293
      %v306 = vadd.f32 %v270, %v293
      %v307 = vadd.f32 %v271, %v293
      %v308 = vadd.f32 %v272, %v293
      %v309 = vadd.f32 %v273, %v293
      %v310 = vadd.f32 %v274, %v293
      %v311 = vadd.f32 %v275, %v293
      %v312 = vadd.f32 %v276, %v293
      %v313 = vadd.f32 %v277, %v293
      %v314 = vadd.f32 %v278, %v293
      %v315 = vadd.f32 %v279, %v293
      %v316 = vadd.f32 %v280, %v293
      %v317 = vadd.f32 %v281, %v293
      %v318 = vadd.f32 %v282, %v293
      %v319 = vadd.f32 %v283, %v293
      %v320 = vadd.f32 %v284, %v293
      %v321 = vadd.f32 %v285, %v293
      %v322 = vadd.f32 %v286, %v293
      %v323 = vadd.f32 %v287, %v293
      %v324 = vadd.f32 %v288, %v293
      %v325 = vadd.f32 %v289, %v293
      %v326 = vadd.f32 %v290, %v293
      %v327 = vld [vmem:[%s215] sm:$0xff]
      %v328 = vld [vmem:[%s215 + $0x8] sm:$0xff]
      %v329 = vld [vmem:[%s215 + $0x10] sm:$0xff]
      %v330 = vld [vmem:[%s215 + $0x18] sm:$0xff]
      %v331 = vld [vmem:[%s215 + $0x20] sm:$0xff]
      %v332 = vld [vmem:[%s215 + $0x28] sm:$0xff]
      %v333 = vld [vmem:[%s215 + $0x30] sm:$0xff]
      %v334 = vld [vmem:[%s215 + $0x38] sm:$0xff]
      %v335 = vld [vmem:[%s215 + $0x40] sm:$0xff]
      %v336 = vld [vmem:[%s215 + $0x48] sm:$0xff]
      %v337 = vld [vmem:[%s215 + $0x50] sm:$0xff]
      %v338 = vld [vmem:[%s215 + $0x58] sm:$0xff]
      %v339 = vld [vmem:[%s215 + $0x60] sm:$0xff]
      %v340 = vld [vmem:[%s215 + $0x68] sm:$0xff]
      %v341 = vld [vmem:[%s215 + $0x70] sm:$0xff]
      %v342 = vld [vmem:[%s215 + $0x78] sm:$0xff]
      %v343 = vld [vmem:[%s215 + $0x80] sm:$0xff]
      %v344 = vld [vmem:[%s215 + $0x88] sm:$0xff]
      %v345 = vld [vmem:[%s215 + $0x90] sm:$0xff]
      %v346 = vld [vmem:[%s215 + $0x98] sm:$0xff]
      %v347 = vld [vmem:[%s215 + $0xa0] sm:$0xff]
      %v348 = vld [vmem:[%s215 + $0xa8] sm:$0xff]
      %v349 = vld [vmem:[%s215 + $0xb0] sm:$0xff]
      %v350 = vld [vmem:[%s215 + $0xb8] sm:$0xff]
      %v351 = vld [vmem:[%s215 + $0xc0] sm:$0xff]
      %v352 = vld [vmem:[%s215 + $0xc8] sm:$0xff]
      %v353 = vld [vmem:[%s215 + $0xd0] sm:$0xff]
      %v354 = vld [vmem:[%s215 + $0xd8] sm:$0xff]
      %v355 = vld [vmem:[%s215 + $0xe0] sm:$0xff]
      %v356 = vld [vmem:[%s215 + $0xe8] sm:$0xff]
      %v357 = vld [vmem:[%s215 + $0xf0] sm:$0xff]
      %v358 = vld [vmem:[%s215 + $0xf8] sm:$0xff]
      %v359 = vadd.f32 %v295, %v327
      %v360 = vadd.f32 %v296, %v328
      %v361 = vadd.f32 %v297, %v329
      %v362 = vadd.f32 %v298, %v330
      %v363 = vadd.f32 %v299, %v331
      %v364 = vadd.f32 %v300, %v332
      %v365 = vadd.f32 %v301, %v333
      %v366 = vadd.f32 %v302, %v334
      %v367 = vadd.f32 %v303, %v335
      %v368 = vadd.f32 %v304, %v336
      %v369 = vadd.f32 %v305, %v337
      %v370 = vadd.f32 %v306, %v338
      %v371 = vadd.f32 %v307, %v339
      %v372 = vadd.f32 %v308, %v340
      %v373 = vadd.f32 %v309, %v341
      %v374 = vadd.f32 %v310, %v342
      %v375 = vadd.f32 %v311, %v343
      %v376 = vadd.f32 %v312, %v344
      %v377 = vadd.f32 %v313, %v345
      %v378 = vadd.f32 %v314, %v346
      %v379 = vadd.f32 %v315, %v347
      %v380 = vadd.f32 %v316, %v348
      %v381 = vadd.f32 %v317, %v349
      %v382 = vadd.f32 %v318, %v350
      %v383 = vadd.f32 %v319, %v351
      %v384 = vadd.f32 %v320, %v352
      %v385 = vadd.f32 %v321, %v353
      %v386 = vadd.f32 %v322, %v354
      %v387 = vadd.f32 %v323, %v355
      %v388 = vadd.f32 %v324, %v356
      %v389 = vadd.f32 %v325, %v357
      %v390 = vadd.f32 %v326, %v358
      %v391 = vmax.f32 %v359, 0.0
      %v392 = vmax.f32 %v360, 0.0
      %v393 = vmax.f32 %v361, 0.0
      %v394 = vmax.f32 %v362, 0.0
      %v395 = vmax.f32 %v363, 0.0
      %v396 = vmax.f32 %v364, 0.0
      %v397 = vmax.f32 %v365, 0.0
      %v398 = vmax.f32 %v366, 0.0
      %v399 = vmax.f32 %v367, 0.0
      %v400 = vmax.f32 %v368, 0.0
      %v401 = vmax.f32 %v369, 0.0
      %v402 = vmax.f32 %v370, 0.0
      %v403 = vmax.f32 %v371, 0.0
      %v404 = vmax.f32 %v372, 0.0
      %v405 = vmax.f32 %v373, 0.0
      %v406 = vmax.f32 %v374, 0.0
      %v407 = vmax.f32 %v375, 0.0
      %v408 = vmax.f32 %v376, 0.0
      %v409 = vmax.f32 %v377, 0.0
      %v410 = vmax.f32 %v378, 0.0
      %v411 = vmax.f32 %v379, 0.0
      %v412 = vmax.f32 %v380, 0.0
      %v413 = vmax.f32 %v381, 0.0
      %v414 = vmax.f32 %v382, 0.0
      %v415 = vmax.f32 %v383, 0.0
      %v416 = vmax.f32 %v384, 0.0
      %v417 = vmax.f32 %v385, 0.0
      %v418 = vmax.f32 %v386, 0.0
      %v419 = vmax.f32 %v387, 0.0
      %v420 = vmax.f32 %v388, 0.0
      %v421 = vmax.f32 %v389, 0.0
      %v422 = vmax.f32 %v390, 0.0
      %423 = vst [vmem:[%s221] sm:$0xff] %v391
      %424 = vst [vmem:[%s221 + $0x8] sm:$0xff] %v392
      %425 = vst [vmem:[%s221 + $0x10] sm:$0xff] %v393
      %426 = vst [vmem:[%s221 + $0x18] sm:$0xff] %v394
      %427 = vst [vmem:[%s221 + $0x20] sm:$0xff] %v395
      %428 = vst [vmem:[%s221 + $0x28] sm:$0xff] %v396
      %429 = vst [vmem:[%s221 + $0x30] sm:$0xff] %v397
      %430 = vst [vmem:[%s221 + $0x38] sm:$0xff] %v398
      %431 = vst [vmem:[%s221 + $0x40] sm:$0xff] %v399
      %432 = vst [vmem:[%s221 + $0x48] sm:$0xff] %v400
      %433 = vst [vmem:[%s221 + $0x50] sm:$0xff] %v401
      %434 = vst [vmem:[%s221 + $0x58] sm:$0xff] %v402
      %435 = vst [vmem:[%s221 + $0x60] sm:$0xff] %v403
      %436 = vst [vmem:[%s221 + $0x68] sm:$0xff] %v404
      %437 = vst [vmem:[%s221 + $0x70] sm:$0xff] %v405
      %438 = vst [vmem:[%s221 + $0x78] sm:$0xff] %v406
      %439 = vst [vmem:[%s221 + $0x80] sm:$0xff] %v407
      %440 = vst [vmem:[%s221 + $0x88] sm:$0xff] %v408
      %441 = vst [vmem:[%s221 + $0x90] sm:$0xff] %v409
      %442 = vst [vmem:[%s221 + $0x98] sm:$0xff] %v410
      %443 = vst [vmem:[%s221 + $0xa0] sm:$0xff] %v411
      %444 = vst [vmem:[%s221 + $0xa8] sm:$0xff] %v412
      %445 = vst [vmem:[%s221 + $0xb0] sm:$0xff] %v413
      %446 = vst [vmem:[%s221 + $0xb8] sm:$0xff] %v414
      %447 = vst [vmem:[%s221 + $0xc0] sm:$0xff] %v415
      %448 = vst [vmem:[%s221 + $0xc8] sm:$0xff] %v416
      %449 = vst [vmem:[%s221 + $0xd0] sm:$0xff] %v417
      %450 = vst [vmem:[%s221 + $0xd8] sm:$0xff] %v418
      %451 = vst [vmem:[%s221 + $0xe0] sm:$0xff] %v419
      %452 = vst [vmem:[%s221 + $0xe8] sm:$0xff] %v420
      %453 = vst [vmem:[%s221 + $0xf0] sm:$0xff] %v421
      %454 = vst [vmem:[%s221 + $0xf8] sm:$0xff] %v422
      %s455 = smul.u32 32, %s15
      %p456 = scmp.lt.s32.totalorder %s455, 63
      %s457 = scalar_select %p456, %s455, 63
      %s458 = smul.addr %s457, 8
      %s459 = scalar_lea.vmem %s4, %s458
      // Predicated region
      $region37: #{_lambda_.7} parent=35 // pred_check
        %p460 = pneg %p127
      $region38: #{_lambda_.7} parent=35 // pred_check_branch
        %462 = sbr.rel (%p460) target = $region40
      $region39: #{_lambda_.7} parent=35 // pred_region
        %s463 = smul.u32 32, %s15
      $region40: #{_lambda_.7} parent=35 // pred_fallthru
        _
    $region36: #{_lambda_.7} parent=5 // pred_fallthru
      _
    %p464 = scmp.le.s32.totalorder 2, %s10
    // Predicated region
    $region41: #{_lambda_.7} parent=5 // pred_check
      %p465 = pneg %p464
    $region42: #{_lambda_.7} parent=5 // pred_check_branch
      %467 = sbr.rel (%p465) target = $region44
    $region43: #{_lambda_.7} parent=5 // pred_region
      %s468 = ssub.s32 %s10, 2
      // Predicated region
      $region45: #{_lambda_.7} parent=43 // pred_check
        %p469 = pneg %p133
      $region46: #{_lambda_.7} parent=43 // pred_check_branch
        %471 = sbr.rel (%p469) target = $region48
      $region47: #{_lambda_.7} parent=43 // pred_region
        %s472 = smul.u32 32, %s16
        %p473 = scmp.lt.s32.totalorder %s472, 63
        %s474 = scalar_select %p473, %s472, 63
        %s475 = smul.addr %s474, 8
        %s476 = scalar_lea.vmem %s4, %s475
      $region48: #{_lambda_.7} parent=43 // pred_fallthru
        _
    $region44: #{_lambda_.7} parent=5 // pred_fallthru
      _
  $region6: #{_lambda_.7} parent=0 // loop_footer
    %s14 = sadd.s32 1, %s10
  $region7: #{_lambda_.7} parent=0 // loop_footer_branch
    %9 = sbr.rel target = $region3
  $region8: #{_lambda_.7} parent=0 // loop_exit
    _

</llo_original>
